<compile_context>
chip_gen: v7x
topology: tpu7x:2x2x1
jax: 0.10.0
libtpu: 0.0.40
codegen_flags: <defaults>
</compile_context>

<pallas_src>
import functools

import jax
import jax.numpy as jnp
from jax.experimental import pallas as pl
from jax.experimental.pallas import tpu as pltpu


def _round_up(v, m):
    return ((v + m - 1) // m) * m


def _gated_attention_kernel(x_ref, wab_ref, bab_ref, wc_ref, bc_ref,
                            a_out_ref, *, hidden_pad):
    """One row-tile of the gated-attention forward pass.

    x_ref   : [tm, K]      (f32 tile of x)
    wab_ref : [K, 2Hp]     (Wa | Wb fused, bf16, Hp = hidden padded to 128 lanes)
    bab_ref : [1, 2Hp]     (ba | bb, f32)
    wc_ref  : [Hp, NC]     (bf16)
    bc_ref  : [1, NC]      (f32)
    a_out   : [tm, NC]
    """
    # Cast x to bf16 on the VPU so both matmuls run the MXU at bf16 rate
    # (f32 accumulation via preferred_element_type).
    x = x_ref[...].astype(jnp.bfloat16)

    # Fused gate projection: [tm, K] @ [K, 2Hp] -> [tm, 2Hp], one MXU pass.
    h = jnp.dot(x, wab_ref[...], preferred_element_type=jnp.float32) + bab_ref[...]

    a = jnp.tanh(h[:, :hidden_pad])          # EUP transcendentals, f32
    b = jax.nn.sigmoid(h[:, hidden_pad:])    # 128-lane-aligned split (zero-cost view)
    gated = (a * b).astype(wc_ref.dtype)     # back to bf16 for the 2nd matmul

    # [tm, Hp] @ [Hp, NC] -> [tm, NC]; narrow output block (NC == full dim).
    A = jnp.dot(gated, wc_ref[...], preferred_element_type=jnp.float32) + bc_ref[...]
    a_out_ref[...] = A.astype(a_out_ref.dtype)


def prepare_params(params, *, compute_dtype=jnp.bfloat16):
    """One-time weight preparation (hoisted out of the per-call path).

    Fuses Wa|Wb into a single [K, 2Hp] matrix so the kernel does one MXU pass
    per x tile, and pads hidden_dim to a 128-lane multiple so the in-kernel
    tanh/sigmoid split lands on a lane boundary.  Zero pad columns are exactly
    neutral: tanh(0)*sigmoid(0) = 0 and the matching zero rows of Wc
    contribute nothing.
    """
    wa, ba, wb, bb, wc, bc = params
    hidden_dim = wa.shape[1]
    hp = _round_up(hidden_dim, 128)
    pad_h = hp - hidden_dim

    def pad_cols(m):
        return jnp.pad(m, ((0, 0), (0, pad_h))) if pad_h else m

    wab = jnp.concatenate([pad_cols(wa), pad_cols(wb)], axis=1).astype(compute_dtype)
    bab = jnp.concatenate([pad_cols(ba), pad_cols(bb)], axis=1).astype(jnp.float32)
    wc_p = (jnp.pad(wc, ((0, pad_h), (0, 0))) if pad_h else wc).astype(compute_dtype)
    bc_p = bc.astype(jnp.float32)
    return wab, bab, wc_p, bc_p, hp


def attention_net_gated(x, prepared, *, tile_rows=1024):
    """Gated-attention forward.  x: [N, input_dim]. Returns (A [N, n_classes], x)."""
    wab, bab, wc_p, bc_p, hidden_pad = prepared
    n, input_dim = x.shape
    two_hp = wab.shape[1]
    n_classes = wc_p.shape[1]
    assert wab.shape[0] == input_dim and two_hp == 2 * hidden_pad

    # Sublane alignment of the row tile depends on the x/output dtype
    # (8 for f32, 16 for bf16, ...).
    sub = max(8, 32 // x.dtype.itemsize)

    # Large row tiles amortize per-grid-step overhead, but cap so the grid has
    # >= 2 iterations (v7x can then shard rows across its 2 TensorCores).  No
    # wrapper-side padding of x: cdiv grid + Pallas' ragged-last-block handling
    # (junk rows in the partial block are never written back).
    tile = min(tile_rows, _round_up(pl.cdiv(n, 2), sub))
    tile = max(sub, min(tile, _round_up(n, sub)))
    grid = (pl.cdiv(n, tile),)

    # Weights/biases are small and fully resident (constant block index, so the
    # pipeline never re-fetches them).
    resident = lambda shape: pl.BlockSpec(shape, lambda i: (0, 0))

    itemsize = x.dtype.itemsize
    cost = pl.CostEstimate(
        flops=2 * n * input_dim * two_hp + 2 * n * hidden_pad * n_classes,
        transcendentals=n * two_hp,
        bytes_accessed=(n * input_dim * itemsize           # x read
                        + n * n_classes * itemsize         # A write
                        + (wab.size + wc_p.size) * wab.dtype.itemsize
                        + (bab.size + bc_p.size) * 4),
    )

    A = pl.pallas_call(
        functools.partial(_gated_attention_kernel, hidden_pad=hidden_pad),
        out_shape=jax.ShapeDtypeStruct((n, n_classes), x.dtype),
        grid_spec=pltpu.PrefetchScalarGridSpec(
            num_scalar_prefetch=0,
            grid=grid,
            in_specs=[
                pl.BlockSpec((tile, input_dim), lambda i: (i, 0)),  # x row tile
                resident((input_dim, two_hp)),                      # Wa|Wb (bf16)
                resident((1, two_hp)),                              # ba|bb (f32)
                resident((hidden_pad, n_classes)),                  # Wc (bf16)
                resident((1, n_classes)),                           # bc (f32)
            ],
            out_specs=pl.BlockSpec((tile, n_classes), lambda i: (i, 0)),
        ),
        compiler_params=pltpu.CompilerParams(
            dimension_semantics=("parallel",),   # megacore-shardable row grid
            vmem_limit_bytes=48 * 1024 * 1024,   # safe within v7x's 64 MiB VMEM
        ),
        cost_estimate=cost,
    )(x, wab, bab, wc_p, bc_p)

    # No x echo through the kernel: the module returns the input unchanged.
    return A, x


def init_params(key, input_dim, hidden_dim, n_classes):
    """Deterministic init mimicking torch.nn.Linear (uniform +-1/sqrt(fan_in))."""
    ks = jax.random.split(key, 6)

    def linear(kw, kb, fan_in, fan_out):
        bound = 1.0 / jnp.sqrt(fan_in)
        w = jax.random.uniform(kw, (fan_in, fan_out), jnp.float32, -bound, bound)
        b = jax.random.uniform(kb, (1, fan_out), jnp.float32, -bound, bound)
        return w, b

    wa, ba = linear(ks[0], ks[1], input_dim, hidden_dim)
    wb, bb = linear(ks[2], ks[3], input_dim, hidden_dim)
    wc, bc = linear(ks[4], ks[5], hidden_dim, n_classes)
    return wa, ba, wb, bb, wc, bc


def reference(x, params):
    """Pure-JAX f32 reference using the unfused weights (checks fusion/padding)."""
    wa, ba, wb, bb, wc, bc = params
    a = jnp.tanh(x @ wa + ba)
    b = jax.nn.sigmoid(x @ wb + bb)
    A = (a * b) @ wc + bc
    return A, x


if __name__ == "__main__":
    # Module defaults: input_dim=256, hidden_dim=256, n_classes=1.
    # N=300 exercises the ragged last block and a 2-step row grid.
    N, INPUT_DIM, HIDDEN_DIM, N_CLASSES = 300, 256, 256, 1

    key = jax.random.PRNGKey(0)
    kx, kp = jax.random.split(key)
    x = jax.random.normal(kx, (N, INPUT_DIM), jnp.float32)
    params = init_params(kp, INPUT_DIM, HIDDEN_DIM, N_CLASSES)

    prepared = prepare_params(params)          # one-time weight prep
    A, x_out = attention_net_gated(x, prepared)
    A = jax.block_until_ready(A)
    x_out = jax.block_until_ready(x_out)

    A_ref, _ = reference(x, params)
    assert A.shape == (N, N_CLASSES) and x_out.shape == (N, INPUT_DIM)
    # bf16 matmul operands (f32 accumulation) => bf16-level tolerance.
    assert jnp.allclose(A, A_ref, atol=2e-2, rtol=2e-2), float(jnp.max(jnp.abs(A - A_ref)))
    assert bool(jnp.array_equal(x_out, x))

    print("KERNEL_OK")
</pallas_src>

<mosaic_0001>
module attributes {stable_mosaic.version = 11 : i64} {
  func.func @_gated_attention_kernel(%arg0: i32, %arg1: memref<152x256xf32, #tpu.memory_space<vmem>>, %arg2: memref<256x512xbf16, #tpu.memory_space<vmem>>, %arg3: memref<1x512xf32, #tpu.memory_space<vmem>>, %arg4: memref<256x1xbf16, #tpu.memory_space<vmem>>, %arg5: memref<1x1xf32, #tpu.memory_space<vmem>>, %arg6: memref<152x1xf32, #tpu.memory_space<vmem>>) attributes {dimension_semantics = [#tpu.dimension_semantics<parallel>], iteration_bounds = array<i64: 2>, scalar_prefetch = 0 : i64, scratch_operands = 0 : i64, tpu.core_type = #tpu.core_type<tc>, window_params = [{transform_indices = @transform_0, window_bounds = array<i64: 152, 256>}, {pipeline_mode = #tpu.pipeline_mode<synchronous>, transform_indices = @transform_1, window_bounds = array<i64: 256, 512>}, {pipeline_mode = #tpu.pipeline_mode<synchronous>, transform_indices = @transform_2, window_bounds = array<i64: 1, 512>}, {pipeline_mode = #tpu.pipeline_mode<synchronous>, transform_indices = @transform_3, window_bounds = array<i64: 256, 1>}, {pipeline_mode = #tpu.pipeline_mode<synchronous>, transform_indices = @transform_4, window_bounds = array<i64: 1, 1>}, {transform_indices = @transform_5, window_bounds = array<i64: 152, 1>}]} {
    %c0 = arith.constant 0 : index
    %c0_0 = arith.constant 0 : index
    %0 = vector.load %arg1[%c0, %c0_0] : memref<152x256xf32, #tpu.memory_space<vmem>>, vector<152x256xf32>
    %1 = arith.truncf %0 : vector<152x256xf32> to vector<152x256xbf16>
    %c0_1 = arith.constant 0 : index
    %c0_2 = arith.constant 0 : index
    %2 = vector.load %arg2[%c0_1, %c0_2] : memref<256x512xbf16, #tpu.memory_space<vmem>>, vector<256x512xbf16>
    %cst = arith.constant dense<0.000000e+00> : vector<152x512xf32>
    %3 = tpu.matmul %1, %2, %cst {dimension_numbers = #tpu.dot_dimension_numbers<[1], [0], [0], [1], [0, 0, 1, 1], [], []>} : vector<152x256xbf16>, vector<256x512xbf16>, vector<152x512xf32> -> vector<152x512xf32>
    %c0_3 = arith.constant 0 : index
    %c0_4 = arith.constant 0 : index
    %4 = vector.load %arg3[%c0_3, %c0_4] : memref<1x512xf32, #tpu.memory_space<vmem>>, vector<1x512xf32>
    %5 = vector.broadcast %4 : vector<1x512xf32> to vector<152x512xf32>
    %6 = arith.addf %3, %5 : vector<152x512xf32>
    %7 = vector.extract_strided_slice %6 {offsets = [0, 0], sizes = [152, 256], strides = [1, 1]} : vector<152x512xf32> to vector<152x256xf32>
    %8 = math.tanh %7 : vector<152x256xf32>
    %9 = vector.extract_strided_slice %6 {offsets = [0, 256], sizes = [152, 256], strides = [1, 1]} : vector<152x512xf32> to vector<152x256xf32>
    %10 = arith.negf %9 : vector<152x256xf32>
    %11 = math.exp %10 : vector<152x256xf32>
    %cst_5 = arith.constant 1.000000e+00 : f32
    %12 = vector.broadcast %cst_5 : f32 to vector<152x256xf32>
    %13 = arith.addf %12, %11 : vector<152x256xf32>
    %14 = arith.divf %12, %13 : vector<152x256xf32>
    %15 = arith.mulf %8, %14 : vector<152x256xf32>
    %16 = arith.truncf %15 : vector<152x256xf32> to vector<152x256xbf16>
    %c0_6 = arith.constant 0 : index
    %c0_7 = arith.constant 0 : index
    %17 = vector.load %arg4[%c0_6, %c0_7] : memref<256x1xbf16, #tpu.memory_space<vmem>>, vector<256x1xbf16>
    %cst_8 = arith.constant dense<0.000000e+00> : vector<152x1xf32>
    %18 = tpu.matmul %16, %17, %cst_8 {dimension_numbers = #tpu.dot_dimension_numbers<[1], [0], [0], [1], [0, 0, 1, 1], [], []>} : vector<152x256xbf16>, vector<256x1xbf16>, vector<152x1xf32> -> vector<152x1xf32>
    %c0_9 = arith.constant 0 : index
    %c0_10 = arith.constant 0 : index
    %19 = vector.load %arg5[%c0_9, %c0_10] : memref<1x1xf32, #tpu.memory_space<vmem>>, vector<1x1xf32>
    %20 = vector.broadcast %19 : vector<1x1xf32> to vector<152x1xf32>
    %21 = arith.addf %18, %20 : vector<152x1xf32>
    %c0_11 = arith.constant 0 : index
    %c0_12 = arith.constant 0 : index
    %22 = vector.load %arg6[%c0_11, %c0_12] : memref<152x1xf32, #tpu.memory_space<vmem>>, vector<152x1xf32>
    tpu.vector_store %arg6[%c0_11, %c0_12], %21 {strides = array<i32>} : memref<152x1xf32, #tpu.memory_space<vmem>>, vector<152x1xf32>,
    return
  }
  func.func @transform_0(%arg0: i32) -> (i32, i32) {
    %c0_i32 = arith.constant 0 : i32
    %c0_i32_0 = arith.constant 0 : i32
    return %arg0, %c0_i32 : i32, i32
  }
  func.func @transform_1(%arg0: i32) -> (i32, i32) {
    %c0_i32 = arith.constant 0 : i32
    %c0_i32_0 = arith.constant 0 : i32
    %c0_i32_1 = arith.constant 0 : i32
    return %c0_i32, %c0_i32_0 : i32, i32
  }
  func.func @transform_2(%arg0: i32) -> (i32, i32) {
    %c0_i32 = arith.constant 0 : i32
    %c0_i32_0 = arith.constant 0 : i32
    %c0_i32_1 = arith.constant 0 : i32
    return %c0_i32, %c0_i32_0 : i32, i32
  }
  func.func @transform_3(%arg0: i32) -> (i32, i32) {
    %c0_i32 = arith.constant 0 : i32
    %c0_i32_0 = arith.constant 0 : i32
    %c0_i32_1 = arith.constant 0 : i32
    return %c0_i32, %c0_i32_0 : i32, i32
  }
  func.func @transform_4(%arg0: i32) -> (i32, i32) {
    %c0_i32 = arith.constant 0 : i32
    %c0_i32_0 = arith.constant 0 : i32
    %c0_i32_1 = arith.constant 0 : i32
    return %c0_i32, %c0_i32_0 : i32, i32
  }
  func.func @transform_5(%arg0: i32) -> (i32, i32) {
    %c0_i32 = arith.constant 0 : i32
    %c0_i32_0 = arith.constant 0 : i32
    return %arg0, %c0_i32 : i32, i32
  }
}

</mosaic_0001>

<llo_original>
// kernel: tpu_custom_call.1
$region0: #{tpu_custom_call.1}
  #allocation0 [shape = 'u32[]', space=smem, size = 0x4, offset = 0x4, fixed_abs, tag = 'smem constant byte address 0x4 - core index']
  #allocation1 [shape = 'u32[144,128]{1,0:T(1,128)}', space=vmem, size = 0x12000, scoped, tag = 'internal scratch']
  #allocation2 [shape = 'f32[1,1]{1,0:T(1,128)S(1)}', space=vmem, size = 0x200, scoped, tag = 'scoped memory for tpu_custom_call.1']
  %s0 = inlined_call_operand.hbm [shape: f32[300,256], index: 0, kind: input, shape index: {}]
  %s1 = inlined_call_operand.hbm [shape: bf16[256,512], index: 1, kind: input, shape index: {}]
  %s2 = inlined_call_operand.vmem [shape: f32[1,512], index: 2, kind: input, shape index: {}]
  %s3 = inlined_call_operand.vmem [shape: bf16[256,1], index: 3, kind: input, shape index: {}]
  %s4 = inlined_call_operand.<no memory space> [shape: f32[1,1], index: 4, kind: input, shape index: {}]
  %s5 = inlined_call_operand.vmem [shape: f32[300,1], index: 5, kind: output, shape index: {}]
  %s6 = sld [smem:[#allocation0]]
  $region61: #{tpu_custom_call.1} parent=0
    _
  %s8 = ssub.s32 1, %s6
  %s9 = scalar_select 0, %s8, %s6
  %v10 = vstv %s4
  %11 = vst [vmem:[#allocation2] sm:$0x1] %v10
  $region1: #{tpu_custom_call.1} parent=0
    #allocation3 [shape = 'u8[311296]{0}', space=vmem, size = 0x4c000, scoped, tag = 'input window, operand 0']
    #allocation4 [shape = 's32[2]{0}', space=sflag, size = 0x8, scoped, tag = 'scoped memory for tpu_custom_call.1']
    #allocation5 [shape = 'u8[262144]{0}', space=vmem, size = 0x40000, scoped, tag = 'input window, operand 1, single buffered']
    #allocation6 [shape = 's32[1]{0}', space=sflag, size = 0x4, scoped, tag = 'scoped memory for tpu_custom_call.1']
    %12 = vsyncpa [#allocation4], 0
    %s13 = scalar_lea.sflag [#allocation4], 1
    %14 = vsyncpa %s13, 0
    %15 = vsyncpa [#allocation6], 0
    loop: start=0, step=1, limit=4
    $region2: #{tpu_custom_call.1} parent=1 // loop_pre_header
      _
    $region3: #{tpu_custom_call.1} parent=1 // loop_header
      %s17 = sphi 0, %s21
      %p18 = scmp.ge.s32.totalorder %s17, 4
      %s27 = sphi 0, %s29
      %s30 = sphi 0, %s27
      %s31 = sphi 0, %s30
      %s47 = sphi 0, %s31
      %s51 = sphi 0, %s51
      %s53 = sphi 0, %s51
      %s54 = sphi 0, %s53
      %s68 = sphi 0, %s54
      %s72 = sphi 0, %s72
      %s74 = sphi 0, %s72
      %s75 = sphi 0, %s74
      %s89 = sphi 0, %s75
      %s93 = sphi 0, %s93
      %s95 = sphi 0, %s93
      %s96 = sphi 0, %s95
      %s110 = sphi 0, %s96
      %s114 = sphi 0, %s114
      %s116 = sphi 0, %s114
      %s117 = sphi 0, %s116
      %s131 = sphi 0, %s117
      %s137 = sphi 0, %s139
      %s140 = sphi 0, %s137
      %s141 = sphi 0, %s140
      %s157 = sphi 0, %s141
    $region4: #{tpu_custom_call.1} parent=1 // loop_header_branch
      %20 = sbr.rel (%p18) target = $region8
    $region5: #{tpu_custom_call.1} parent=1 // loop_body
      %s22 = ssub.s32 %s17, 1
      %s23 = ssub.s32 %s17, 2
      %s24 = sadd.s32 %s17, 1
      %s25 = ssub.s32 %s17, %s24
      %p26 = scmp.eq.s32.totalorder %s25, 0
      %s28 = sadd.s32 %s27, 1
      %s29 = scalar_select %p26, %s27, %s28
      %p32 = pneg %p26
      %p33 = scmp.eq.s32.totalorder %s17, 1
      %p34 = por %p32, %p33
      %p35 = scmp.ne.s32.totalorder %s27, %s30
      %p36 = scmp.eq.s32.totalorder %s17, 0
      %p37 = por %p35, %p36
      %p38 = scmp.ne.s32.totalorder %s27, %s30
      %p39 = scmp.eq.s32.totalorder %s22, 1
      %p40 = por %p38, %p39
      %p41 = scmp.ne.s32.totalorder %s30, %s31
      %p42 = scmp.eq.s32.totalorder %s22, 0
      %p43 = por %p41, %p42
      %p44 = scmp.ne.s32.totalorder %s30, %s31
      %p45 = scmp.eq.s32.totalorder %s23, 1
      %p46 = por %p44, %p45
      %p48 = scmp.ne.s32.totalorder %s31, %s47
      %p49 = scmp.eq.s32.totalorder %s23, 0
      %p50 = por %p48, %p49
      %s52 = sadd.s32 %s51, 1
      %p55 = scmp.eq.s32.totalorder %s17, 1
      %p56 = scmp.ne.s32.totalorder %s51, %s53
      %p57 = scmp.eq.s32.totalorder %s17, 0
      %p58 = por %p56, %p57
      %p59 = scmp.ne.s32.totalorder %s51, %s53
      %p60 = scmp.eq.s32.totalorder %s22, 1
      %p61 = por %p59, %p60
      %p62 = scmp.ne.s32.totalorder %s53, %s54
      %p63 = scmp.eq.s32.totalorder %s22, 0
      %p64 = por %p62, %p63
      %p65 = scmp.ne.s32.totalorder %s53, %s54
      %p66 = scmp.eq.s32.totalorder %s23, 1
      %p67 = por %p65, %p66
      %p69 = scmp.ne.s32.totalorder %s54, %s68
      %p70 = scmp.eq.s32.totalorder %s23, 0
      %p71 = por %p69, %p70
      %s73 = sadd.s32 %s72, 1
      %p76 = scmp.eq.s32.totalorder %s17, 1
      %p77 = scmp.ne.s32.totalorder %s72, %s74
      %p78 = scmp.eq.s32.totalorder %s17, 0
      %p79 = por %p77, %p78
      %p80 = scmp.ne.s32.totalorder %s72, %s74
      %p81 = scmp.eq.s32.totalorder %s22, 1
      %p82 = por %p80, %p81
      %p83 = scmp.ne.s32.totalorder %s74, %s75
      %p84 = scmp.eq.s32.totalorder %s22, 0
      %p85 = por %p83, %p84
      %p86 = scmp.ne.s32.totalorder %s74, %s75
      %p87 = scmp.eq.s32.totalorder %s23, 1
      %p88 = por %p86, %p87
      %p90 = scmp.ne.s32.totalorder %s75, %s89
      %p91 = scmp.eq.s32.totalorder %s23, 0
      %p92 = por %p90, %p91
      %s94 = sadd.s32 %s93, 1
      %p97 = scmp.eq.s32.totalorder %s17, 1
      %p98 = scmp.ne.s32.totalorder %s93, %s95
      %p99 = scmp.eq.s32.totalorder %s17, 0
      %p100 = por %p98, %p99
      %p101 = scmp.ne.s32.totalorder %s93, %s95
      %p102 = scmp.eq.s32.totalorder %s22, 1
      %p103 = por %p101, %p102
      %p104 = scmp.ne.s32.totalorder %s95, %s96
      %p105 = scmp.eq.s32.totalorder %s22, 0
      %p106 = por %p104, %p105
      %p107 = scmp.ne.s32.totalorder %s95, %s96
      %p108 = scmp.eq.s32.totalorder %s23, 1
      %p109 = por %p107, %p108
      %p111 = scmp.ne.s32.totalorder %s96, %s110
      %p112 = scmp.eq.s32.totalorder %s23, 0
      %p113 = por %p111, %p112
      %s115 = sadd.s32 %s114, 1
      %p118 = scmp.eq.s32.totalorder %s17, 1
      %p119 = scmp.ne.s32.totalorder %s114, %s116
      %p120 = scmp.eq.s32.totalorder %s17, 0
      %p121 = por %p119, %p120
      %p122 = scmp.ne.s32.totalorder %s114, %s116
      %p123 = scmp.eq.s32.totalorder %s22, 1
      %p124 = por %p122, %p123
      %p125 = scmp.ne.s32.totalorder %s116, %s117
      %p126 = scmp.eq.s32.totalorder %s22, 0
      %p127 = por %p125, %p126
      %p128 = scmp.ne.s32.totalorder %s116, %s117
      %p129 = scmp.eq.s32.totalorder %s23, 1
      %p130 = por %p128, %p129
      %p132 = scmp.ne.s32.totalorder %s117, %s131
      %p133 = scmp.eq.s32.totalorder %s23, 0
      %p134 = por %p132, %p133
      %s135 = ssub.s32 %s17, %s24
      %p136 = scmp.eq.s32.totalorder %s135, 0
      %s138 = sadd.s32 %s137, 1
      %s139 = scalar_select %p136, %s137, %s138
      %p142 = pneg %p136
      %p143 = scmp.eq.s32.totalorder %s17, 1
      %p144 = por %p142, %p143
      %p145 = scmp.ne.s32.totalorder %s137, %s140
      %p146 = scmp.eq.s32.totalorder %s17, 0
      %p147 = por %p145, %p146
      %p148 = scmp.ne.s32.totalorder %s137, %s140
      %p149 = scmp.eq.s32.totalorder %s22, 1
      %p150 = por %p148, %p149
      %p151 = scmp.ne.s32.totalorder %s140, %s141
      %p152 = scmp.eq.s32.totalorder %s22, 0
      %p153 = por %p151, %p152
      %p154 = scmp.ne.s32.totalorder %s140, %s141
      %p155 = scmp.eq.s32.totalorder %s23, 1
      %p156 = por %p154, %p155
      %p158 = scmp.ne.s32.totalorder %s141, %s157
      %p159 = scmp.eq.s32.totalorder %s23, 0
      %p160 = por %p158, %p159
      %p161 = scmp.le.s32.totalorder 1, %s17
      %p162 = scmp.lt.s32.totalorder %s17, 3
      %p163 = pnand %p161, %p162
      %p164 = pneg %p163
      // Predicated region
      $region9: #{tpu_custom_call.1} parent=5 // pred_check
        _
      $region10: #{tpu_custom_call.1} parent=5 // pred_check_branch
        %166 = sbr.rel (%p163) target = $region12
      $region11: #{tpu_custom_call.1} parent=5 // pred_region
        %s167 = ssub.s32 %s17, 1
        // Predicated region
        $region13: #{tpu_custom_call.1} parent=11 // pred_check
          %p168 = pneg %p64
        $region14: #{tpu_custom_call.1} parent=11 // pred_check_branch
          %170 = sbr.rel (%p168) target = $region16
        $region15: #{tpu_custom_call.1} parent=11 // pred_region
          %s172 = ssub.s32 8192, 8192
          %173 = vsyncadd [#allocation6], %s172
          %s174 = sshll.u32 [#allocation5], 4
          %s175 = int_to_ptr.vmem [resolvable:$true] %s174
          %180 = dma.hbm_to_vmem [thread:$0]  %s1, 8192, %s175, [#allocation6], 256, 256, 16
        $region16: #{tpu_custom_call.1} parent=11 // pred_fallthru
          _
        // Predicated region
        $region17: #{tpu_custom_call.1} parent=11 // pred_check
          %p181 = pneg %p85
        $region18: #{tpu_custom_call.1} parent=11 // pred_check_branch
          %183 = sbr.rel (%p181) target = $region20
        $region19: #{tpu_custom_call.1} parent=11 // pred_region
          _
        $region20: #{tpu_custom_call.1} parent=11 // pred_fallthru
          _
        // Predicated region
        $region21: #{tpu_custom_call.1} parent=11 // pred_check
          %p184 = pneg %p106
        $region22: #{tpu_custom_call.1} parent=11 // pred_check_branch
          %186 = sbr.rel (%p184) target = $region24
        $region23: #{tpu_custom_call.1} parent=11 // pred_region
          _
        $region24: #{tpu_custom_call.1} parent=11 // pred_fallthru
          _
        // Predicated region
        $region25: #{tpu_custom_call.1} parent=11 // pred_check
          %p187 = pneg %p127
        $region26: #{tpu_custom_call.1} parent=11 // pred_check_branch
          %189 = sbr.rel (%p187) target = $region28
        $region27: #{tpu_custom_call.1} parent=11 // pred_region
          _
        $region28: #{tpu_custom_call.1} parent=11 // pred_fallthru
          _
      $region12: #{tpu_custom_call.1} parent=5 // pred_fallthru
        _
      %p190 = scmp.lt.s32.totalorder %s17, 2
      // Predicated region
      $region29: #{tpu_custom_call.1} parent=5 // pred_check
        %p191 = pneg %p190
      $region30: #{tpu_custom_call.1} parent=5 // pred_check_branch
        %193 = sbr.rel (%p191) target = $region32
      $region31: #{tpu_custom_call.1} parent=5 // pred_region
        // Predicated region
        $region33: #{tpu_custom_call.1} parent=31 // pred_check
          %p194 = pneg %p37
        $region34: #{tpu_custom_call.1} parent=31 // pred_check_branch
          %196 = sbr.rel (%p194) target = $region36
        $region35: #{tpu_custom_call.1} parent=31 // pred_region
          %s197 = sand.u32 %s27, 1
          %s198 = scalar_lea.sflag [#allocation4], %s197
          %s199 = sand.u32 %s27, 1
          %s200 = smul.addr %s199, 304
          %s201 = scalar_lea.vmem [#allocation3], %s200
          %s202 = smul.u32 19, %s17
          %s204 = ssub.s32 4864, 4864
          %205 = vsyncadd %s198, %s204
          %s206 = smul.addr %s202, 2
          %s207 = smul.addr %s206, 128
          %s208 = scalar_lea.hbm %s0, %s207
          %s209 = sshll.u32 %s201, 4
          %s210 = int_to_ptr.vmem [resolvable:$true] %s209
          %215 = dma.hbm_to_vmem [thread:$0]  %s208, 4864, %s210, %s198, 256, 256, 16
        $region36: #{tpu_custom_call.1} parent=31 // pred_fallthru
          _
      $region32: #{tpu_custom_call.1} parent=5 // pred_fallthru
        _
      %p216 = scmp.le.s32.totalorder 1, %s17
      %p217 = scmp.lt.s32.totalorder %s17, 3
      %p218 = pnand %p216, %p217
      %p219 = pneg %p218
      // Predicated region
      $region37: #{tpu_custom_call.1} parent=5 // pred_check
        _
      $region38: #{tpu_custom_call.1} parent=5 // pred_check_branch
        %221 = sbr.rel (%p218) target = $region40
      $region39: #{tpu_custom_call.1} parent=5 // pred_region
        %s222 = ssub.s32 %s17, 1
        %s223 = sand.u32 %s30, 1
        %s224 = scalar_lea.sflag [#allocation4], %s223
        %s225 = sand.u32 %s30, 1
        %s226 = smul.addr %s225, 304
        %s227 = scalar_lea.vmem [#allocation3], %s226
        // Predicated region
        $region41: #{tpu_custom_call.1} parent=39 // pred_check
          %p228 = pneg %p43
        $region42: #{tpu_custom_call.1} parent=39 // pred_check_branch
          %230 = sbr.rel (%p228) target = $region44
        $region43: #{tpu_custom_call.1} parent=39 // pred_region
          %231 = dma.done %s224, 4864
        $region44: #{tpu_custom_call.1} parent=39 // pred_fallthru
          _
        // Predicated region
        $region45: #{tpu_custom_call.1} parent=39 // pred_check
          %p232 = pneg %p64
        $region46: #{tpu_custom_call.1} parent=39 // pred_check_branch
          %234 = sbr.rel (%p232) target = $region48
        $region47: #{tpu_custom_call.1} parent=39 // pred_region
          %235 = dma.done [#allocation6], 8192
        $region48: #{tpu_custom_call.1} parent=39 // pred_fallthru
          _
        %s236 = sand.u32 %s30, 1
        %s237 = scalar_lea.sflag [#allocation4], %s236
        %s238 = sand.u32 %s30, 1
        %s239 = smul.addr %s238, 304
        %s240 = scalar_lea.vmem [#allocation3], %s239
        %p241 = pneg %p43
        %p242 = pneg %p40
        %p243 = pneg %p64
        %p244 = pneg %p61
        %p245 = pneg %p85
        %p246 = pneg %p82
        %p247 = pneg %p106
        %p248 = pneg %p103
        %p249 = pneg %p127
        %p250 = pneg %p124
        %p251 = pneg %p153
        %p252 = pneg %p150
        %s253 = smul.u32 19, %s22
        %p254 = scmp.lt.s32.totalorder %s253, 37
        %s255 = scalar_select %p254, %s253, 37
        %s256 = smul.addr %s255, 8
        %s257 = scalar_lea.vmem %s5, %s256
        %s258 = smul.u32 19, %s22
        %s259 = smul.u32 19, %s22
        %p260 = scmp.lt.s32.totalorder %s259, 37
        %s261 = scalar_select %p260, %s259, 37
        %s262 = smul.addr %s261, 8
        %s263 = scalar_lea.vmem %s5, %s262
        %s264 = smul.u32 19, %s22
        %v266 = vld [vmem:[%s227] sm:$0xff]
        %v267 = vld [vmem:[%s227 + $0x8] sm:$0xff]
        %v268 = vld [vmem:[%s227 + $0x10] sm:$0xff]
        %v269 = vld [vmem:[%s227 + $0x18] sm:$0xff]
        %v270 = vld [vmem:[%s227 + $0x20] sm:$0xff]
        %v271 = vld [vmem:[%s227 + $0x28] sm:$0xff]
        %v272 = vld [vmem:[%s227 + $0x30] sm:$0xff]
        %v273 = vld [vmem:[%s227 + $0x38] sm:$0xff]
        %v274 = vld [vmem:[%s227 + $0x40] sm:$0xff]
        %v275 = vld [vmem:[%s227 + $0x48] sm:$0xff]
        %v276 = vld [vmem:[%s227 + $0x50] sm:$0xff]
        %v277 = vld [vmem:[%s227 + $0x58] sm:$0xff]
        %v278 = vld [vmem:[%s227 + $0x60] sm:$0xff]
        %v279 = vld [vmem:[%s227 + $0x68] sm:$0xff]
        %v280 = vld [vmem:[%s227 + $0x70] sm:$0xff]
        %v281 = vld [vmem:[%s227 + $0x78] sm:$0xff]
        %v282 = vld [vmem:[%s227 + $0x80] sm:$0xff]
        %v283 = vld [vmem:[%s227 + $0x88] sm:$0xff]
        %v284 = vld [vmem:[%s227 + $0x90] sm:$0xff]
        %v285 = vld [vmem:[%s227 + $0x98] sm:$0xff]
        %v286 = vld [vmem:[%s227 + $0xa0] sm:$0xff]
        %v287 = vld [vmem:[%s227 + $0xa8] sm:$0xff]
        %v288 = vld [vmem:[%s227 + $0xb0] sm:$0xff]
        %v289 = vld [vmem:[%s227 + $0xb8] sm:$0xff]
        %v290 = vld [vmem:[%s227 + $0xc0] sm:$0xff]
        %v291 = vld [vmem:[%s227 + $0xc8] sm:$0xff]
        %v292 = vld [vmem:[%s227 + $0xd0] sm:$0xff]
        %v293 = vld [vmem:[%s227 + $0xd8] sm:$0xff]
        %v294 = vld [vmem:[%s227 + $0xe0] sm:$0xff]
        %v295 = vld [vmem:[%s227 + $0xe8] sm:$0xff]
        %v296 = vld [vmem:[%s227 + $0xf0] sm:$0xff]
        %v297 = vld [vmem:[%s227 + $0xf8] sm:$0xff]
        %v298 = vld [vmem:[%s227 + $0x100] sm:$0xff]
        %v299 = vld [vmem:[%s227 + $0x108] sm:$0xff]
        %v300 = vld [vmem:[%s227 + $0x110] sm:$0xff]
        %v301 = vld [vmem:[%s227 + $0x118] sm:$0xff]
        %v302 = vld [vmem:[%s227 + $0x120] sm:$0xff]
        %v303 = vld [vmem:[%s227 + $0x128] sm:$0xff]
        %v304 = vpack.c.bf16 %v268, %v266
        %v305 = vpack.c.bf16 %v269, %v267
        %v306 = vpack.c.bf16 %v272, %v270
        %v307 = vpack.c.bf16 %v273, %v271
        %v308 = vpack.c.bf16 %v276, %v274
        %v309 = vpack.c.bf16 %v277, %v275
        %v310 = vpack.c.bf16 %v280, %v278
        %v311 = vpack.c.bf16 %v281, %v279
        %v312 = vpack.c.bf16 %v284, %v282
        %v313 = vpack.c.bf16 %v285, %v283
        %v314 = vpack.c.bf16 %v288, %v286
        %v315 = vpack.c.bf16 %v289, %v287
        %v316 = vpack.c.bf16 %v292, %v290
        %v317 = vpack.c.bf16 %v293, %v291
        %v318 = vpack.c.bf16 %v296, %v294
        %v319 = vpack.c.bf16 %v297, %v295
        %v320 = vpack.c.bf16 %v300, %v298
        %v321 = vpack.c.bf16 %v301, %v299
        %v322 = vpack.c.bf16 %v302, %v302
        %v323 = vpack.c.bf16 %v303, %v303
        %v324 = vld [vmem:[#allocation5] sm:$0xff]
        %v325 = vld [vmem:[#allocation5 + $0x8] sm:$0xff]
        %v326 = vld [vmem:[#allocation5 + $0x10] sm:$0xff]
        %v327 = vld [vmem:[#allocation5 + $0x18] sm:$0xff]
        %v328 = vld [vmem:[#allocation5 + $0x20] sm:$0xff]
        %v329 = vld [vmem:[#allocation5 + $0x28] sm:$0xff]
        %v330 = vld [vmem:[#allocation5 + $0x30] sm:$0xff]
        %v331 = vld [vmem:[#allocation5 + $0x38] sm:$0xff]
        %v332 = vld [vmem:[#allocation5 + $0x40] sm:$0xff]
        %v333 = vld [vmem:[#allocation5 + $0x48] sm:$0xff]
        %v334 = vld [vmem:[#allocation5 + $0x50] sm:$0xff]
        %v335 = vld [vmem:[#allocation5 + $0x58] sm:$0xff]
        %v336 = vld [vmem:[#allocation5 + $0x60] sm:$0xff]
        %v337 = vld [vmem:[#allocation5 + $0x68] sm:$0xff]
        %v338 = vld [vmem:[#allocation5 + $0x70] sm:$0xff]
        %v339 = vld [vmem:[#allocation5 + $0x78] sm:$0xff]
        %v340 = vld [vmem:[#allocation5 + $0x80] sm:$0xff]
        %v341 = vld [vmem:[#allocation5 + $0x88] sm:$0xff]
        %v342 = vld [vmem:[#allocation5 + $0x90] sm:$0xff]
        %v343 = vld [vmem:[#allocation5 + $0x98] sm:$0xff]
        %v344 = vld [vmem:[#allocation5 + $0xa0] sm:$0xff]
        %v345 = vld [vmem:[#allocation5 + $0xa8] sm:$0xff]
        %v346 = vld [vmem:[#allocation5 + $0xb0] sm:$0xff]
        %v347 = vld [vmem:[#allocation5 + $0xb8] sm:$0xff]
        %v348 = vld [vmem:[#allocation5 + $0xc0] sm:$0xff]
        %v349 = vld [vmem:[#allocation5 + $0xc8] sm:$0xff]
        %v350 = vld [vmem:[#allocation5 + $0xd0] sm:$0xff]
        %v351 = vld [vmem:[#allocation5 + $0xd8] sm:$0xff]
        %v352 = vld [vmem:[#allocation5 + $0xe0] sm:$0xff]
        %v353 = vld [vmem:[#allocation5 + $0xe8] sm:$0xff]
        %v354 = vld [vmem:[#allocation5 + $0xf0] sm:$0xff]
        %v355 = vld [vmem:[#allocation5 + $0xf8] sm:$0xff]
        %v356 = vld [vmem:[#allocation5 + $0x100] sm:$0xff]
        %v357 = vld [vmem:[#allocation5 + $0x108] sm:$0xff]
        %v358 = vld [vmem:[#allocation5 + $0x110] sm:$0xff]
        %v359 = vld [vmem:[#allocation5 + $0x118] sm:$0xff]
        %v360 = vld [vmem:[#allocation5 + $0x120] sm:$0xff]
        %v361 = vld [vmem:[#allocation5 + $0x128] sm:$0xff]
        %v362 = vld [vmem:[#allocation5 + $0x130] sm:$0xff]
        %v363 = vld [vmem:[#allocation5 + $0x138] sm:$0xff]
        %v364 = vld [vmem:[#allocation5 + $0x140] sm:$0xff]
        %v365 = vld [vmem:[#allocation5 + $0x148] sm:$0xff]
        %v366 = vld [vmem:[#allocation5 + $0x150] sm:$0xff]
        %v367 = vld [vmem:[#allocation5 + $0x158] sm:$0xff]
        %v368 = vld [vmem:[#allocation5 + $0x160] sm:$0xff]
        %v369 = vld [vmem:[#allocation5 + $0x168] sm:$0xff]
        %v370 = vld [vmem:[#allocation5 + $0x170] sm:$0xff]
        %v371 = vld [vmem:[#allocation5 + $0x178] sm:$0xff]
        %v372 = vld [vmem:[#allocation5 + $0x180] sm:$0xff]
        %v373 = vld [vmem:[#allocation5 + $0x188] sm:$0xff]
        %v374 = vld [vmem:[#allocation5 + $0x190] sm:$0xff]
        %v375 = vld [vmem:[#allocation5 + $0x198] sm:$0xff]
        %v376 = vld [vmem:[#allocation5 + $0x1a0] sm:$0xff]
        %v377 = vld [vmem:[#allocation5 + $0x1a8] sm:$0xff]
        %v378 = vld [vmem:[#allocation5 + $0x1b0] sm:$0xff]
        %v379 = vld [vmem:[#allocation5 + $0x1b8] sm:$0xff]
        %v380 = vld [vmem:[#allocation5 + $0x1c0] sm:$0xff]
        %v381 = vld [vmem:[#allocation5 + $0x1c8] sm:$0xff]
        %v382 = vld [vmem:[#allocation5 + $0x1d0] sm:$0xff]
        %v383 = vld [vmem:[#allocation5 + $0x1d8] sm:$0xff]
        %v384 = vld [vmem:[#allocation5 + $0x1e0] sm:$0xff]
        %v385 = vld [vmem:[#allocation5 + $0x1e8] sm:$0xff]
        %v386 = vld [vmem:[#allocation5 + $0x1f0] sm:$0xff]
        %v387 = vld [vmem:[#allocation5 + $0x1f8] sm:$0xff]
        %v388 = vld [vmem:[%s2] sm:$0xf]
        %v390 = vlaneseq
        %v391 = vshrl.u32 %v390, 7
        %v392 = vsub.s32 0, %v391
        %v393 = vrot.slane %v388, %v392
        %v394 = vlaneseq
        %v395 = vshrl.u32 %v394, 7
        %v396 = vsub.s32 1, %v395
        %v397 = vrot.slane %v388, %v396
        %v398 = vlaneseq
        %v399 = vshrl.u32 %v398, 7
        %v400 = vsub.s32 2, %v399
        %v401 = vrot.slane %v388, %v400
        %v402 = vlaneseq
        %v403 = vshrl.u32 %v402, 7
        %v404 = vsub.s32 3, %v403
        %v405 = vrot.slane %v388, %v404
        %v474 = vunpack.c.l.b16 %v324
        %v475 = vunpack.c.h.b16 %v324
        %v476 = vunpack.c.l.b16 %v325
        %v477 = vunpack.c.h.b16 %v325
        %v478 = vunpack.c.l.b16 %v326
        %v479 = vunpack.c.h.b16 %v326
        %v480 = vunpack.c.l.b16 %v327
        %v481 = vunpack.c.h.b16 %v327
        %v482 = vunpack.c.l.b16 %v328
        %v483 = vunpack.c.h.b16 %v328
        %v484 = vunpack.c.l.b16 %v329
        %v485 = vunpack.c.h.b16 %v329
        %v486 = vunpack.c.l.b16 %v330
        %v487 = vunpack.c.h.b16 %v330
        %v488 = vunpack.c.l.b16 %v331
        %v489 = vunpack.c.h.b16 %v331
        %v490 = vunpack.c.l.b16 %v332
        %v491 = vunpack.c.h.b16 %v332
        %v492 = vunpack.c.l.b16 %v333
        %v493 = vunpack.c.h.b16 %v333
        %v494 = vunpack.c.l.b16 %v334
        %v495 = vunpack.c.h.b16 %v334
        %v496 = vunpack.c.l.b16 %v335
        %v497 = vunpack.c.h.b16 %v335
        %v498 = vunpack.c.l.b16 %v336
        %v499 = vunpack.c.h.b16 %v336
        %v500 = vunpack.c.l.b16 %v337
        %v501 = vunpack.c.h.b16 %v337
        %v502 = vunpack.c.l.b16 %v338
        %v503 = vunpack.c.h.b16 %v338
        %v504 = vunpack.c.l.b16 %v339
        %v505 = vunpack.c.h.b16 %v339
        %v506 = vunpack.c.l.b16 %v340
        %v507 = vunpack.c.h.b16 %v340
        %v508 = vunpack.c.l.b16 %v341
        %v509 = vunpack.c.h.b16 %v341
        %v510 = vunpack.c.l.b16 %v342
        %v511 = vunpack.c.h.b16 %v342
        %v512 = vunpack.c.l.b16 %v343
        %v513 = vunpack.c.h.b16 %v343
        %v514 = vunpack.c.l.b16 %v344
        %v515 = vunpack.c.h.b16 %v344
        %v516 = vunpack.c.l.b16 %v345
        %v517 = vunpack.c.h.b16 %v345
        %v518 = vunpack.c.l.b16 %v346
        %v519 = vunpack.c.h.b16 %v346
        %v520 = vunpack.c.l.b16 %v347
        %v521 = vunpack.c.h.b16 %v347
        %v522 = vunpack.c.l.b16 %v348
        %v523 = vunpack.c.h.b16 %v348
        %v524 = vunpack.c.l.b16 %v349
        %v525 = vunpack.c.h.b16 %v349
        %v526 = vunpack.c.l.b16 %v350
        %v527 = vunpack.c.h.b16 %v350
        %v528 = vunpack.c.l.b16 %v351
        %v529 = vunpack.c.h.b16 %v351
        %v530 = vunpack.c.l.b16 %v352
        %v531 = vunpack.c.h.b16 %v352
        %v532 = vunpack.c.l.b16 %v353
        %v533 = vunpack.c.h.b16 %v353
        %v534 = vunpack.c.l.b16 %v354
        %v535 = vunpack.c.h.b16 %v354
        %v536 = vunpack.c.l.b16 %v355
        %v537 = vunpack.c.h.b16 %v355
        %v538 = vunpack.c.l.b16 %v356
        %v539 = vunpack.c.h.b16 %v356
        %v540 = vunpack.c.l.b16 %v357
        %v541 = vunpack.c.h.b16 %v357
        %v542 = vunpack.c.l.b16 %v358
        %v543 = vunpack.c.h.b16 %v358
        %v544 = vunpack.c.l.b16 %v359
        %v545 = vunpack.c.h.b16 %v359
        %v546 = vunpack.c.l.b16 %v360
        %v547 = vunpack.c.h.b16 %v360
        %v548 = vunpack.c.l.b16 %v361
        %v549 = vunpack.c.h.b16 %v361
        %v550 = vunpack.c.l.b16 %v362
        %v551 = vunpack.c.h.b16 %v362
        %v552 = vunpack.c.l.b16 %v363
        %v553 = vunpack.c.h.b16 %v363
        %v554 = vunpack.c.l.b16 %v364
        %v555 = vunpack.c.h.b16 %v364
        %v556 = vunpack.c.l.b16 %v365
        %v557 = vunpack.c.h.b16 %v365
        %v558 = vunpack.c.l.b16 %v366
        %v559 = vunpack.c.h.b16 %v366
        %v560 = vunpack.c.l.b16 %v367
        %v561 = vunpack.c.h.b16 %v367
        %v562 = vunpack.c.l.b16 %v368
        %v563 = vunpack.c.h.b16 %v368
        %v564 = vunpack.c.l.b16 %v369
        %v565 = vunpack.c.h.b16 %v369
        %v566 = vunpack.c.l.b16 %v370
        %v567 = vunpack.c.h.b16 %v370
        %v568 = vunpack.c.l.b16 %v371
        %v569 = vunpack.c.h.b16 %v371
        %v570 = vunpack.c.l.b16 %v372
        %v571 = vunpack.c.h.b16 %v372
        %v572 = vunpack.c.l.b16 %v373
        %v573 = vunpack.c.h.b16 %v373
        %v574 = vunpack.c.l.b16 %v374
        %v575 = vunpack.c.h.b16 %v374
        %v576 = vunpack.c.l.b16 %v375
        %v577 = vunpack.c.h.b16 %v375
        %v578 = vunpack.c.l.b16 %v376
        %v579 = vunpack.c.h.b16 %v376
        %v580 = vunpack.c.l.b16 %v377
        %v581 = vunpack.c.h.b16 %v377
        %v582 = vunpack.c.l.b16 %v378
        %v583 = vunpack.c.h.b16 %v378
        %v584 = vunpack.c.l.b16 %v379
        %v585 = vunpack.c.h.b16 %v379
        %v586 = vunpack.c.l.b16 %v380
        %v587 = vunpack.c.h.b16 %v380
        %v588 = vunpack.c.l.b16 %v381
        %v589 = vunpack.c.h.b16 %v381
        %v590 = vunpack.c.l.b16 %v382
        %v591 = vunpack.c.h.b16 %v382
        %v592 = vunpack.c.l.b16 %v383
        %v593 = vunpack.c.h.b16 %v383
        %v594 = vunpack.c.l.b16 %v384
        %v595 = vunpack.c.h.b16 %v384
        %v596 = vunpack.c.l.b16 %v385
        %v597 = vunpack.c.h.b16 %v385
        %v598 = vunpack.c.l.b16 %v386
        %v599 = vunpack.c.h.b16 %v386
        %v600 = vunpack.c.l.b16 %v387
        %v601 = vunpack.c.h.b16 %v387
        %v602 = vpack.c.b16 %v478, %v474
        %v603 = vpack.c.b16 %v479, %v475
        %v604 = vpack.c.b16 %v480, %v476
        %v605 = vpack.c.b16 %v481, %v477
        %v606 = vpack.c.b16 %v486, %v482
        %v607 = vpack.c.b16 %v487, %v483
        %v608 = vpack.c.b16 %v488, %v484
        %v609 = vpack.c.b16 %v489, %v485
        %v610 = vpack.c.b16 %v494, %v490
        %v611 = vpack.c.b16 %v495, %v491
        %v612 = vpack.c.b16 %v496, %v492
        %v613 = vpack.c.b16 %v497, %v493
        %v614 = vpack.c.b16 %v502, %v498
        %v615 = vpack.c.b16 %v503, %v499
        %v616 = vpack.c.b16 %v504, %v500
        %v617 = vpack.c.b16 %v505, %v501
        %v618 = vpack.c.b16 %v510, %v506
        %v619 = vpack.c.b16 %v511, %v507
        %v620 = vpack.c.b16 %v512, %v508
        %v621 = vpack.c.b16 %v513, %v509
        %v622 = vpack.c.b16 %v518, %v514
        %v623 = vpack.c.b16 %v519, %v515
        %v624 = vpack.c.b16 %v520, %v516
        %v625 = vpack.c.b16 %v521, %v517
        %v626 = vpack.c.b16 %v526, %v522
        %v627 = vpack.c.b16 %v527, %v523
        %v628 = vpack.c.b16 %v528, %v524
        %v629 = vpack.c.b16 %v529, %v525
        %v630 = vpack.c.b16 %v534, %v530
        %v631 = vpack.c.b16 %v535, %v531
        %v632 = vpack.c.b16 %v536, %v532
        %v633 = vpack.c.b16 %v537, %v533
        %v634 = vpack.c.b16 %v542, %v538
        %v635 = vpack.c.b16 %v543, %v539
        %v636 = vpack.c.b16 %v544, %v540
        %v637 = vpack.c.b16 %v545, %v541
        %v638 = vpack.c.b16 %v550, %v546
        %v639 = vpack.c.b16 %v551, %v547
        %v640 = vpack.c.b16 %v552, %v548
        %v641 = vpack.c.b16 %v553, %v549
        %v642 = vpack.c.b16 %v558, %v554
        %v643 = vpack.c.b16 %v559, %v555
        %v644 = vpack.c.b16 %v560, %v556
        %v645 = vpack.c.b16 %v561, %v557
        %v646 = vpack.c.b16 %v566, %v562
        %v647 = vpack.c.b16 %v567, %v563
        %v648 = vpack.c.b16 %v568, %v564
        %v649 = vpack.c.b16 %v569, %v565
        %v650 = vpack.c.b16 %v574, %v570
        %v651 = vpack.c.b16 %v575, %v571
        %v652 = vpack.c.b16 %v576, %v572
        %v653 = vpack.c.b16 %v577, %v573
        %v654 = vpack.c.b16 %v582, %v578
        %v655 = vpack.c.b16 %v583, %v579
        %v656 = vpack.c.b16 %v584, %v580
        %v657 = vpack.c.b16 %v585, %v581
        %v658 = vpack.c.b16 %v590, %v586
        %v659 = vpack.c.b16 %v591, %v587
        %v660 = vpack.c.b16 %v592, %v588
        %v661 = vpack.c.b16 %v593, %v589
        %v662 = vpack.c.b16 %v598, %v594
        %v663 = vpack.c.b16 %v599, %v595
        %v664 = vpack.c.b16 %v600, %v596
        %v665 = vpack.c.b16 %v601, %v597
        %730 = vmatprep.subr.bf16.mxu0 %v603
        %731 = vmatpush1.bf16.msra.mxu0 %v602
        %732 = vmatprep.subr.bf16.mxu0 %v607
        %733 = vmatpush1.bf16.msra.mxu0 %v606
        %734 = vmatprep.subr.bf16.mxu0 %v611
        %735 = vmatpush1.bf16.msra.mxu0 %v610
        %736 = vmatprep.subr.bf16.mxu0 %v615
        %737 = vmatpush1.bf16.msra.mxu0 %v614
        %738 = vmatprep.subr.bf16.mxu0 %v619
        %739 = vmatpush1.bf16.msra.mxu0 %v618
        %740 = vmatprep.subr.bf16.mxu0 %v623
        %741 = vmatpush1.bf16.msra.mxu0 %v622
        %742 = vmatprep.subr.bf16.mxu0 %v627
        %743 = vmatpush1.bf16.msra.mxu0 %v626
        %744 = vmatprep.subr.bf16.mxu0 %v631
        %745 = vmatpush1.bf16.msra.mxu0 %v630
        %746 = vmatprep.subr.bf16.mxu0 %v635
        %747 = vmatpush1.bf16.msra.mxu0 %v634
        %748 = vmatprep.subr.bf16.mxu0 %v639
        %749 = vmatpush1.bf16.msra.mxu0 %v638
        %750 = vmatprep.subr.bf16.mxu0 %v643
        %751 = vmatpush1.bf16.msra.mxu0 %v642
        %752 = vmatprep.subr.bf16.mxu0 %v647
        %753 = vmatpush1.bf16.msra.mxu0 %v646
        %754 = vmatprep.subr.bf16.mxu0 %v651
        %755 = vmatpush1.bf16.msra.mxu0 %v650
        %756 = vmatprep.subr.bf16.mxu0 %v655
        %757 = vmatpush1.bf16.msra.mxu0 %v654
        %758 = vmatprep.subr.bf16.mxu0 %v659
        %759 = vmatpush1.bf16.msra.mxu0 %v658
        %760 = vmatprep.subr.bf16.mxu0 %v663
        %761 = vmatpush1.bf16.msra.mxu0 %v662
        %762 = vmatprep.mubr.bf16.mxu0 %v305
        %763 = vmatmul.mubr.bf16.gmra.mrb[0].mxu0 %v304
        %v764 = vpop.f32.mrb[0].mxu0
        %v765 = vadd.f32 %v393, %v764
        %v766 = vpop.f32.mrb[0].mxu0
        %v767 = vadd.f32 %v397, %v766
        %v768 = vpop.f32.mrb[0].mxu0
        %v769 = vadd.f32 %v393, %v768
        %v770 = vpop.f32.mrb[0].mxu0
        %v771 = vadd.f32 %v397, %v770
        %772 = vmatprep.mubr.bf16.mxu0 %v307
        %773 = vmatmul.mubr.bf16.gmra.mrb[0].mxu0 %v306
        %v774 = vpop.f32.mrb[0].mxu0
        %v775 = vadd.f32 %v393, %v774
        %v776 = vpop.f32.mrb[0].mxu0
        %v777 = vadd.f32 %v397, %v776
        %v778 = vpop.f32.mrb[0].mxu0
        %v779 = vadd.f32 %v393, %v778
        %v780 = vpop.f32.mrb[0].mxu0
        %v781 = vadd.f32 %v397, %v780
        %782 = vmatprep.mubr.bf16.mxu0 %v309
        %783 = vmatmul.mubr.bf16.gmra.mrb[0].mxu0 %v308
        %v784 = vpop.f32.mrb[0].mxu0
        %v785 = vadd.f32 %v393, %v784
        %v786 = vpop.f32.mrb[0].mxu0
        %v787 = vadd.f32 %v397, %v786
        %v788 = vpop.f32.mrb[0].mxu0
        %v789 = vadd.f32 %v393, %v788
        %v790 = vpop.f32.mrb[0].mxu0
        %v791 = vadd.f32 %v397, %v790
        %792 = vmatprep.mubr.bf16.mxu0 %v311
        %793 = vmatmul.mubr.bf16.gmra.mrb[0].mxu0 %v310
        %v794 = vpop.f32.mrb[0].mxu0
        %v795 = vadd.f32 %v393, %v794
        %v796 = vpop.f32.mrb[0].mxu0
        %v797 = vadd.f32 %v397, %v796
        %v798 = vpop.f32.mrb[0].mxu0
        %v799 = vadd.f32 %v393, %v798
        %v800 = vpop.f32.mrb[0].mxu0
        %v801 = vadd.f32 %v397, %v800
        %802 = vmatprep.mubr.bf16.mxu0 %v313
        %803 = vmatmul.mubr.bf16.gmra.mrb[0].mxu0 %v312
        %v804 = vpop.f32.mrb[0].mxu0
        %v805 = vadd.f32 %v393, %v804
        %v806 = vpop.f32.mrb[0].mxu0
        %v807 = vadd.f32 %v397, %v806
        %v808 = vpop.f32.mrb[0].mxu0
        %v809 = vadd.f32 %v393, %v808
        %v810 = vpop.f32.mrb[0].mxu0
        %v811 = vadd.f32 %v397, %v810
        %812 = vmatprep.mubr.bf16.mxu0 %v315
        %813 = vmatmul.mubr.bf16.gmra.mrb[0].mxu0 %v314
        %v814 = vpop.f32.mrb[0].mxu0
        %v815 = vadd.f32 %v393, %v814
        %v816 = vpop.f32.mrb[0].mxu0
        %v817 = vadd.f32 %v397, %v816
        %v818 = vpop.f32.mrb[0].mxu0
        %v819 = vadd.f32 %v393, %v818
        %v820 = vpop.f32.mrb[0].mxu0
        %v821 = vadd.f32 %v397, %v820
        %822 = vmatprep.mubr.bf16.mxu0 %v317
        %823 = vmatmul.mubr.bf16.gmra.mrb[0].mxu0 %v316
        %v824 = vpop.f32.mrb[0].mxu0
        %v825 = vadd.f32 %v393, %v824
        %v826 = vpop.f32.mrb[0].mxu0
        %v827 = vadd.f32 %v397, %v826
        %v828 = vpop.f32.mrb[0].mxu0
        %v829 = vadd.f32 %v393, %v828
        %v830 = vpop.f32.mrb[0].mxu0
        %v831 = vadd.f32 %v397, %v830
        %832 = vmatprep.mubr.bf16.mxu0 %v319
        %833 = vmatmul.mubr.bf16.gmra.mrb[0].mxu0 %v318
        %v834 = vpop.f32.mrb[0].mxu0
        %v835 = vadd.f32 %v393, %v834
        %v836 = vpop.f32.mrb[0].mxu0
        %v837 = vadd.f32 %v397, %v836
        %v838 = vpop.f32.mrb[0].mxu0
        %v839 = vadd.f32 %v393, %v838
        %v840 = vpop.f32.mrb[0].mxu0
        %v841 = vadd.f32 %v397, %v840
        %842 = vmatprep.mubr.bf16.mxu0 %v321
        %843 = vmatmul.mubr.bf16.gmra.mrb[0].mxu0 %v320
        %v844 = vpop.f32.mrb[0].mxu0
        %v845 = vadd.f32 %v393, %v844
        %v846 = vpop.f32.mrb[0].mxu0
        %v847 = vadd.f32 %v397, %v846
        %v848 = vpop.f32.mrb[0].mxu0
        %v849 = vadd.f32 %v393, %v848
        %v850 = vpop.f32.mrb[0].mxu0
        %v851 = vadd.f32 %v397, %v850
        %852 = vmatprep.mubr.bf16.mxu0 %v323
        %853 = vmatmul.mubr.bf16.gmra.mrb[0].mxu0 %v322
        %v854 = vpop.f32.mrb[0].mxu0
        %v855 = vadd.f32 %v393, %v854
        %v856 = vpop.f32.mrb[0].mxu0
        %v857 = vadd.f32 %v397, %v856
        %v858 = vpop.f32.mrb[0].mxu0
        %v859 = vpop.f32.mrb[0].mxu0
        %860 = vdwg.mxu0
        %861 = vmatprep.subr.bf16.mxu0 %v605
        %862 = vmatpush1.bf16.msra.mxu0 %v604
        %863 = vmatprep.subr.bf16.mxu0 %v609
        %864 = vmatpush1.bf16.msra.mxu0 %v608
        %865 = vmatprep.subr.bf16.mxu0 %v613
        %866 = vmatpush1.bf16.msra.mxu0 %v612
        %867 = vmatprep.subr.bf16.mxu0 %v617
        %868 = vmatpush1.bf16.msra.mxu0 %v616
        %869 = vmatprep.subr.bf16.mxu0 %v621
        %870 = vmatpush1.bf16.msra.mxu0 %v620
        %871 = vmatprep.subr.bf16.mxu0 %v625
        %872 = vmatpush1.bf16.msra.mxu0 %v624
        %873 = vmatprep.subr.bf16.mxu0 %v629
        %874 = vmatpush1.bf16.msra.mxu0 %v628
        %875 = vmatprep.subr.bf16.mxu0 %v633
        %876 = vmatpush1.bf16.msra.mxu0 %v632
        %877 = vmatprep.subr.bf16.mxu0 %v637
        %878 = vmatpush1.bf16.msra.mxu0 %v636
        %879 = vmatprep.subr.bf16.mxu0 %v641
        %880 = vmatpush1.bf16.msra.mxu0 %v640
        %881 = vmatprep.subr.bf16.mxu0 %v645
        %882 = vmatpush1.bf16.msra.mxu0 %v644
        %883 = vmatprep.subr.bf16.mxu0 %v649
        %884 = vmatpush1.bf16.msra.mxu0 %v648
        %885 = vmatprep.subr.bf16.mxu0 %v653
        %886 = vmatpush1.bf16.msra.mxu0 %v652
        %887 = vmatprep.subr.bf16.mxu0 %v657
        %888 = vmatpush1.bf16.msra.mxu0 %v656
        %889 = vmatprep.subr.bf16.mxu0 %v661
        %890 = vmatpush1.bf16.msra.mxu0 %v660
        %891 = vmatprep.subr.bf16.mxu0 %v665
        %892 = vmatpush1.bf16.msra.mxu0 %v664
        %893 = vmatprep.mubr.bf16.mxu0 %v305
        %894 = vmatmul.mubr.bf16.gmra.mrb[0].mxu0 %v304
        %v895 = vpop.f32.mrb[0].mxu0
        %v896 = vadd.f32 %v401, %v895
        %v897 = vpop.f32.mrb[0].mxu0
        %v898 = vadd.f32 %v405, %v897
        %v899 = vpop.f32.mrb[0].mxu0
        %v900 = vadd.f32 %v401, %v899
        %v901 = vpop.f32.mrb[0].mxu0
        %v902 = vadd.f32 %v405, %v901
        %903 = vmatprep.mubr.bf16.mxu0 %v307
        %904 = vmatmul.mubr.bf16.gmra.mrb[0].mxu0 %v306
        %v905 = vpop.f32.mrb[0].mxu0
        %v906 = vadd.f32 %v401, %v905
        %v907 = vpop.f32.mrb[0].mxu0
        %v908 = vadd.f32 %v405, %v907
        %v909 = vpop.f32.mrb[0].mxu0
        %v910 = vadd.f32 %v401, %v909
        %v911 = vpop.f32.mrb[0].mxu0
        %v912 = vadd.f32 %v405, %v911
        %913 = vmatprep.mubr.bf16.mxu0 %v309
        %914 = vmatmul.mubr.bf16.gmra.mrb[0].mxu0 %v308
        %v915 = vpop.f32.mrb[0].mxu0
        %v916 = vadd.f32 %v401, %v915
        %v917 = vpop.f32.mrb[0].mxu0
        %v918 = vadd.f32 %v405, %v917
        %v919 = vpop.f32.mrb[0].mxu0
        %v920 = vadd.f32 %v401, %v919
        %v921 = vpop.f32.mrb[0].mxu0
        %v922 = vadd.f32 %v405, %v921
        %923 = vmatprep.mubr.bf16.mxu0 %v311
        %924 = vmatmul.mubr.bf16.gmra.mrb[0].mxu0 %v310
        %v925 = vpop.f32.mrb[0].mxu0
        %v926 = vadd.f32 %v401, %v925
        %v927 = vpop.f32.mrb[0].mxu0
        %v928 = vadd.f32 %v405, %v927
        %v929 = vpop.f32.mrb[0].mxu0
        %v930 = vadd.f32 %v401, %v929
        %v931 = vpop.f32.mrb[0].mxu0
        %v932 = vadd.f32 %v405, %v931
        %933 = vmatprep.mubr.bf16.mxu0 %v313
        %934 = vmatmul.mubr.bf16.gmra.mrb[0].mxu0 %v312
        %v935 = vpop.f32.mrb[0].mxu0
        %v936 = vadd.f32 %v401, %v935
        %v937 = vpop.f32.mrb[0].mxu0
        %v938 = vadd.f32 %v405, %v937
        %v939 = vpop.f32.mrb[0].mxu0
        %v940 = vadd.f32 %v401, %v939
        %v941 = vpop.f32.mrb[0].mxu0
        %v942 = vadd.f32 %v405, %v941
        %943 = vmatprep.mubr.bf16.mxu0 %v315
        %944 = vmatmul.mubr.bf16.gmra.mrb[0].mxu0 %v314
        %v945 = vpop.f32.mrb[0].mxu0
        %v946 = vadd.f32 %v401, %v945
        %v947 = vpop.f32.mrb[0].mxu0
        %v948 = vadd.f32 %v405, %v947
        %v949 = vpop.f32.mrb[0].mxu0
        %v950 = vadd.f32 %v401, %v949
        %v951 = vpop.f32.mrb[0].mxu0
        %v952 = vadd.f32 %v405, %v951
        %953 = vmatprep.mubr.bf16.mxu0 %v317
        %954 = vmatmul.mubr.bf16.gmra.mrb[0].mxu0 %v316
        %v955 = vpop.f32.mrb[0].mxu0
        %v956 = vadd.f32 %v401, %v955
        %v957 = vpop.f32.mrb[0].mxu0
        %v958 = vadd.f32 %v405, %v957
        %v959 = vpop.f32.mrb[0].mxu0
        %v960 = vadd.f32 %v401, %v959
        %v961 = vpop.f32.mrb[0].mxu0
        %v962 = vadd.f32 %v405, %v961
        %963 = vmatprep.mubr.bf16.mxu0 %v319
        %964 = vmatmul.mubr.bf16.gmra.mrb[0].mxu0 %v318
        %v965 = vpop.f32.mrb[0].mxu0
        %v966 = vadd.f32 %v401, %v965
        %v967 = vpop.f32.mrb[0].mxu0
        %v968 = vadd.f32 %v405, %v967
        %v969 = vpop.f32.mrb[0].mxu0
        %v970 = vadd.f32 %v401, %v969
        %v971 = vpop.f32.mrb[0].mxu0
        %v972 = vadd.f32 %v405, %v971
        %973 = vmatprep.mubr.bf16.mxu0 %v321
        %974 = vmatmul.mubr.bf16.gmra.mrb[0].mxu0 %v320
        %v975 = vpop.f32.mrb[0].mxu0
        %v976 = vadd.f32 %v401, %v975
        %v977 = vpop.f32.mrb[0].mxu0
        %v978 = vadd.f32 %v405, %v977
        %v979 = vpop.f32.mrb[0].mxu0
        %v980 = vadd.f32 %v401, %v979
        %v981 = vpop.f32.mrb[0].mxu0
        %v982 = vadd.f32 %v405, %v981
        %983 = vmatprep.mubr.bf16.mxu0 %v323
        %984 = vmatmul.mubr.bf16.gmra.mrb[0].mxu0 %v322
        %v985 = vpop.f32.mrb[0].mxu0
        %v986 = vadd.f32 %v401, %v985
        %v987 = vpop.f32.mrb[0].mxu0
        %v988 = vadd.f32 %v405, %v987
        %v989 = vpop.f32.mrb[0].mxu0
        %v990 = vpop.f32.mrb[0].mxu0
        %991 = vdwg.mxu0
        %v992 = vtanh.pop %v765
        %v993 = vtanh.pop %v767
        %v994 = vtanh.pop %v769
        %v995 = vtanh.pop %v771
        %v996 = vtanh.pop %v775
        %v997 = vtanh.pop %v777
        %v998 = vtanh.pop %v779
        %v999 = vtanh.pop %v781
        %v1000 = vtanh.pop %v785
        %v1001 = vtanh.pop %v787
        %v1002 = vtanh.pop %v789
        %v1003 = vtanh.pop %v791
        %v1004 = vtanh.pop %v795
        %v1005 = vtanh.pop %v797
        %v1006 = vtanh.pop %v799
        %v1007 = vtanh.pop %v801
        %v1008 = vtanh.pop %v805
        %v1009 = vtanh.pop %v807
        %v1010 = vtanh.pop %v809
        %v1011 = vtanh.pop %v811
        %v1012 = vtanh.pop %v815
        %v1013 = vtanh.pop %v817
        %v1014 = vtanh.pop %v819
        %v1015 = vtanh.pop %v821
        %v1016 = vtanh.pop %v825
        %v1017 = vtanh.pop %v827
        %v1018 = vtanh.pop %v829
        %v1019 = vtanh.pop %v831
        %v1020 = vtanh.pop %v835
        %v1021 = vtanh.pop %v837
        %v1022 = vtanh.pop %v839
        %v1023 = vtanh.pop %v841
        %v1024 = vtanh.pop %v845
        %v1025 = vtanh.pop %v847
        %v1026 = vtanh.pop %v849
        %v1027 = vtanh.pop %v851
        %v1028 = vtanh.pop %v855
        %v1029 = vtanh.pop %v857
        %v1030 = vxor.u32 %v896, 2147483648
        %v1031 = vxor.u32 %v898, 2147483648
        %v1032 = vxor.u32 %v900, 2147483648
        %v1033 = vxor.u32 %v902, 2147483648
        %v1034 = vxor.u32 %v906, 2147483648
        %v1035 = vxor.u32 %v908, 2147483648
        %v1036 = vxor.u32 %v910, 2147483648
        %v1037 = vxor.u32 %v912, 2147483648
        %v1038 = vxor.u32 %v916, 2147483648
        %v1039 = vxor.u32 %v918, 2147483648
        %v1040 = vxor.u32 %v920, 2147483648
        %v1041 = vxor.u32 %v922, 2147483648
        %v1042 = vxor.u32 %v926, 2147483648
        %v1043 = vxor.u32 %v928, 2147483648
        %v1044 = vxor.u32 %v930, 2147483648
        %v1045 = vxor.u32 %v932, 2147483648
        %v1046 = vxor.u32 %v936, 2147483648
        %v1047 = vxor.u32 %v938, 2147483648
        %v1048 = vxor.u32 %v940, 2147483648
        %v1049 = vxor.u32 %v942, 2147483648
        %v1050 = vxor.u32 %v946, 2147483648
        %v1051 = vxor.u32 %v948, 2147483648
        %v1052 = vxor.u32 %v950, 2147483648
        %v1053 = vxor.u32 %v952, 2147483648
        %v1054 = vxor.u32 %v956, 2147483648
        %v1055 = vxor.u32 %v958, 2147483648
        %v1056 = vxor.u32 %v960, 2147483648
        %v1057 = vxor.u32 %v962, 2147483648
        %v1058 = vxor.u32 %v966, 2147483648
        %v1059 = vxor.u32 %v968, 2147483648
        %v1060 = vxor.u32 %v970, 2147483648
        %v1061 = vxor.u32 %v972, 2147483648
        %v1062 = vxor.u32 %v976, 2147483648
        %v1063 = vxor.u32 %v978, 2147483648
        %v1064 = vxor.u32 %v980, 2147483648
        %v1065 = vxor.u32 %v982, 2147483648
        %v1066 = vxor.u32 %v986, 2147483648
        %v1067 = vxor.u32 %v988, 2147483648
        %v1068 = vmul.f32 %v1030, 1.442695
        %v1069 = vpow.pop %v1068
        %v1070 = vmul.f32 %v1031, 1.442695
        %v1071 = vpow.pop %v1070
        %v1072 = vmul.f32 %v1032, 1.442695
        %v1073 = vpow.pop %v1072
        %v1074 = vmul.f32 %v1033, 1.442695
        %v1075 = vpow.pop %v1074
        %v1076 = vmul.f32 %v1034, 1.442695
        %v1077 = vpow.pop %v1076
        %v1078 = vmul.f32 %v1035, 1.442695
        %v1079 = vpow.pop %v1078
        %v1080 = vmul.f32 %v1036, 1.442695
        %v1081 = vpow.pop %v1080
        %v1082 = vmul.f32 %v1037, 1.442695
        %v1083 = vpow.pop %v1082
        %v1084 = vmul.f32 %v1038, 1.442695
        %v1085 = vpow.pop %v1084
        %v1086 = vmul.f32 %v1039, 1.442695
        %v1087 = vpow.pop %v1086
        %v1088 = vmul.f32 %v1040, 1.442695
        %v1089 = vpow.pop %v1088
        %v1090 = vmul.f32 %v1041, 1.442695
        %v1091 = vpow.pop %v1090
        %v1092 = vmul.f32 %v1042, 1.442695
        %v1093 = vpow.pop %v1092
        %v1094 = vmul.f32 %v1043, 1.442695
        %v1095 = vpow.pop %v1094
        %v1096 = vmul.f32 %v1044, 1.442695
        %v1097 = vpow.pop %v1096
        %v1098 = vmul.f32 %v1045, 1.442695
        %v1099 = vpow.pop %v1098
        %v1100 = vmul.f32 %v1046, 1.442695
        %v1101 = vpow.pop %v1100
        %v1102 = vmul.f32 %v1047, 1.442695
        %v1103 = vpow.pop %v1102
        %v1104 = vmul.f32 %v1048, 1.442695
        %v1105 = vpow.pop %v1104
        %v1106 = vmul.f32 %v1049, 1.442695
        %v1107 = vpow.pop %v1106
        %v1108 = vmul.f32 %v1050, 1.442695
        %v1109 = vpow.pop %v1108
        %v1110 = vmul.f32 %v1051, 1.442695
        %v1111 = vpow.pop %v1110
        %v1112 = vmul.f32 %v1052, 1.442695
        %v1113 = vpow.pop %v1112
        %v1114 = vmul.f32 %v1053, 1.442695
        %v1115 = vpow.pop %v1114
        %v1116 = vmul.f32 %v1054, 1.442695
        %v1117 = vpow.pop %v1116
        %v1118 = vmul.f32 %v1055, 1.442695
        %v1119 = vpow.pop %v1118
        %v1120 = vmul.f32 %v1056, 1.442695
        %v1121 = vpow.pop %v1120
        %v1122 = vmul.f32 %v1057, 1.442695
        %v1123 = vpow.pop %v1122
        %v1124 = vmul.f32 %v1058, 1.442695
        %v1125 = vpow.pop %v1124
        %v1126 = vmul.f32 %v1059, 1.442695
        %v1127 = vpow.pop %v1126
        %v1128 = vmul.f32 %v1060, 1.442695
        %v1129 = vpow.pop %v1128
        %v1130 = vmul.f32 %v1061, 1.442695
        %v1131 = vpow.pop %v1130
        %v1132 = vmul.f32 %v1062, 1.442695
        %v1133 = vpow.pop %v1132
        %v1134 = vmul.f32 %v1063, 1.442695
        %v1135 = vpow.pop %v1134
        %v1136 = vmul.f32 %v1064, 1.442695
        %v1137 = vpow.pop %v1136
        %v1138 = vmul.f32 %v1065, 1.442695
        %v1139 = vpow.pop %v1138
        %v1140 = vmul.f32 %v1066, 1.442695
        %v1141 = vpow.pop %v1140
        %v1142 = vmul.f32 %v1067, 1.442695
        %v1143 = vpow.pop %v1142
        %v1144 = vadd.f32 %v1069, 1.0
        %v1145 = vadd.f32 %v1071, 1.0
        %v1146 = vadd.f32 %v1073, 1.0
        %v1147 = vadd.f32 %v1075, 1.0
        %v1148 = vadd.f32 %v1077, 1.0
        %v1149 = vadd.f32 %v1079, 1.0
        %v1150 = vadd.f32 %v1081, 1.0
        %v1151 = vadd.f32 %v1083, 1.0
        %v1152 = vadd.f32 %v1085, 1.0
        %v1153 = vadd.f32 %v1087, 1.0
        %v1154 = vadd.f32 %v1089, 1.0
        %v1155 = vadd.f32 %v1091, 1.0
        %v1156 = vadd.f32 %v1093, 1.0
        %v1157 = vadd.f32 %v1095, 1.0
        %v1158 = vadd.f32 %v1097, 1.0
        %v1159 = vadd.f32 %v1099, 1.0
        %v1160 = vadd.f32 %v1101, 1.0
        %v1161 = vadd.f32 %v1103, 1.0
        %v1162 = vadd.f32 %v1105, 1.0
        %v1163 = vadd.f32 %v1107, 1.0
        %v1164 = vadd.f32 %v1109, 1.0
        %v1165 = vadd.f32 %v1111, 1.0
        %v1166 = vadd.f32 %v1113, 1.0
        %v1167 = vadd.f32 %v1115, 1.0
        %v1168 = vadd.f32 %v1117, 1.0
        %v1169 = vadd.f32 %v1119, 1.0
        %v1170 = vadd.f32 %v1121, 1.0
        %v1171 = vadd.f32 %v1123, 1.0
        %v1172 = vadd.f32 %v1125, 1.0
        %v1173 = vadd.f32 %v1127, 1.0
        %v1174 = vadd.f32 %v1129, 1.0
        %v1175 = vadd.f32 %v1131, 1.0
        %v1176 = vadd.f32 %v1133, 1.0
        %v1177 = vadd.f32 %v1135, 1.0
        %v1178 = vadd.f32 %v1137, 1.0
        %v1179 = vadd.f32 %v1139, 1.0
        %v1180 = vadd.f32 %v1141, 1.0
        %v1181 = vadd.f32 %v1143, 1.0
        %v1182 = vrcp.pop %v1144
        %v1183 = vmul.f32 1.0, %v1182
        %v1184 = vrcp.pop %v1145
        %v1185 = vmul.f32 1.0, %v1184
        %v1186 = vrcp.pop %v1146
        %v1187 = vmul.f32 1.0, %v1186
        %v1188 = vrcp.pop %v1147
        %v1189 = vmul.f32 1.0, %v1188
        %v1190 = vrcp.pop %v1148
        %v1191 = vmul.f32 1.0, %v1190
        %v1192 = vrcp.pop %v1149
        %v1193 = vmul.f32 1.0, %v1192
        %v1194 = vrcp.pop %v1150
        %v1195 = vmul.f32 1.0, %v1194
        %v1196 = vrcp.pop %v1151
        %v1197 = vmul.f32 1.0, %v1196
        %v1198 = vrcp.pop %v1152
        %v1199 = vmul.f32 1.0, %v1198
        %v1200 = vrcp.pop %v1153
        %v1201 = vmul.f32 1.0, %v1200
        %v1202 = vrcp.pop %v1154
        %v1203 = vmul.f32 1.0, %v1202
        %v1204 = vrcp.pop %v1155
        %v1205 = vmul.f32 1.0, %v1204
        %v1206 = vrcp.pop %v1156
        %v1207 = vmul.f32 1.0, %v1206
        %v1208 = vrcp.pop %v1157
        %v1209 = vmul.f32 1.0, %v1208
        %v1210 = vrcp.pop %v1158
        %v1211 = vmul.f32 1.0, %v1210
        %v1212 = vrcp.pop %v1159
        %v1213 = vmul.f32 1.0, %v1212
        %v1214 = vrcp.pop %v1160
        %v1215 = vmul.f32 1.0, %v1214
        %v1216 = vrcp.pop %v1161
        %v1217 = vmul.f32 1.0, %v1216
        %v1218 = vrcp.pop %v1162
        %v1219 = vmul.f32 1.0, %v1218
        %v1220 = vrcp.pop %v1163
        %v1221 = vmul.f32 1.0, %v1220
        %v1222 = vrcp.pop %v1164
        %v1223 = vmul.f32 1.0, %v1222
        %v1224 = vrcp.pop %v1165
        %v1225 = vmul.f32 1.0, %v1224
        %v1226 = vrcp.pop %v1166
        %v1227 = vmul.f32 1.0, %v1226
        %v1228 = vrcp.pop %v1167
        %v1229 = vmul.f32 1.0, %v1228
        %v1230 = vrcp.pop %v1168
        %v1231 = vmul.f32 1.0, %v1230
        %v1232 = vrcp.pop %v1169
        %v1233 = vmul.f32 1.0, %v1232
        %v1234 = vrcp.pop %v1170
        %v1235 = vmul.f32 1.0, %v1234
        %v1236 = vrcp.pop %v1171
        %v1237 = vmul.f32 1.0, %v1236
        %v1238 = vrcp.pop %v1172
        %v1239 = vmul.f32 1.0, %v1238
        %v1240 = vrcp.pop %v1173
        %v1241 = vmul.f32 1.0, %v1240
        %v1242 = vrcp.pop %v1174
        %v1243 = vmul.f32 1.0, %v1242
        %v1244 = vrcp.pop %v1175
        %v1245 = vmul.f32 1.0, %v1244
        %v1246 = vrcp.pop %v1176
        %v1247 = vmul.f32 1.0, %v1246
        %v1248 = vrcp.pop %v1177
        %v1249 = vmul.f32 1.0, %v1248
        %v1250 = vrcp.pop %v1178
        %v1251 = vmul.f32 1.0, %v1250
        %v1252 = vrcp.pop %v1179
        %v1253 = vmul.f32 1.0, %v1252
        %v1254 = vrcp.pop %v1180
        %v1255 = vmul.f32 1.0, %v1254
        %v1256 = vrcp.pop %v1181
        %v1257 = vmul.f32 1.0, %v1256
        %v1258 = vmul.f32 %v992, %v1183
        %v1259 = vmul.f32 %v993, %v1185
        %v1260 = vmul.f32 %v994, %v1187
        %v1261 = vmul.f32 %v995, %v1189
        %v1262 = vmul.f32 %v996, %v1191
        %v1263 = vmul.f32 %v997, %v1193
        %v1264 = vmul.f32 %v998, %v1195
        %v1265 = vmul.f32 %v999, %v1197
        %v1266 = vmul.f32 %v1000, %v1199
        %v1267 = vmul.f32 %v1001, %v1201
        %v1268 = vmul.f32 %v1002, %v1203
        %v1269 = vmul.f32 %v1003, %v1205
        %v1270 = vmul.f32 %v1004, %v1207
        %v1271 = vmul.f32 %v1005, %v1209
        %v1272 = vmul.f32 %v1006, %v1211
        %v1273 = vmul.f32 %v1007, %v1213
        %v1274 = vmul.f32 %v1008, %v1215
        %v1275 = vmul.f32 %v1009, %v1217
        %v1276 = vmul.f32 %v1010, %v1219
        %v1277 = vmul.f32 %v1011, %v1221
        %v1278 = vmul.f32 %v1012, %v1223
        %v1279 = vmul.f32 %v1013, %v1225
        %v1280 = vmul.f32 %v1014, %v1227
        %v1281 = vmul.f32 %v1015, %v1229
        %v1282 = vmul.f32 %v1016, %v1231
        %v1283 = vmul.f32 %v1017, %v1233
        %v1284 = vmul.f32 %v1018, %v1235
        %v1285 = vmul.f32 %v1019, %v1237
        %v1286 = vmul.f32 %v1020, %v1239
        %v1287 = vmul.f32 %v1021, %v1241
        %v1288 = vmul.f32 %v1022, %v1243
        %v1289 = vmul.f32 %v1023, %v1245
        %v1290 = vmul.f32 %v1024, %v1247
        %v1291 = vmul.f32 %v1025, %v1249
        %v1292 = vmul.f32 %v1026, %v1251
        %v1293 = vmul.f32 %v1027, %v1253
        %v1294 = vmul.f32 %v1028, %v1255
        %v1295 = vmul.f32 %v1029, %v1257
        %v1296 = vpack.c.bf16 %v1260, %v1258
        %v1297 = vpack.c.bf16 %v1261, %v1259
        %v1298 = vpack.c.bf16 %v1264, %v1262
        %v1299 = vpack.c.bf16 %v1265, %v1263
        %v1300 = vpack.c.bf16 %v1268, %v1266
        %v1301 = vpack.c.bf16 %v1269, %v1267
        %v1302 = vpack.c.bf16 %v1272, %v1270
        %v1303 = vpack.c.bf16 %v1273, %v1271
        %v1304 = vpack.c.bf16 %v1276, %v1274
        %v1305 = vpack.c.bf16 %v1277, %v1275
        %v1306 = vpack.c.bf16 %v1280, %v1278
        %v1307 = vpack.c.bf16 %v1281, %v1279
        %v1308 = vpack.c.bf16 %v1284, %v1282
        %v1309 = vpack.c.bf16 %v1285, %v1283
        %v1310 = vpack.c.bf16 %v1288, %v1286
        %v1311 = vpack.c.bf16 %v1289, %v1287
        %v1312 = vpack.c.bf16 %v1292, %v1290
        %v1313 = vpack.c.bf16 %v1293, %v1291
        %v1314 = vpack.c.bf16 %v1294, %v1294
        %v1315 = vpack.c.bf16 %v1295, %v1295
        %v1316 = vld [vmem:[%s3] sm:$0xf]
        %v1317 = vld [vmem:[%s3 + $0x4] sm:$0xf]
        %v1318 = vld [vmem:[%s3 + $0x8] sm:$0xf]
        %v1319 = vld [vmem:[%s3 + $0xc] sm:$0xf]
        %v1320 = vld [vmem:[%s3 + $0x10] sm:$0xf]
        %v1321 = vld [vmem:[%s3 + $0x14] sm:$0xf]
        %v1322 = vld [vmem:[%s3 + $0x18] sm:$0xf]
        %v1323 = vld [vmem:[%s3 + $0x1c] sm:$0xf]
        %v1324 = vld [vmem:[%s3 + $0x20] sm:$0xf]
        %v1325 = vld [vmem:[%s3 + $0x24] sm:$0xf]
        %v1326 = vld [vmem:[%s3 + $0x28] sm:$0xf]
        %v1327 = vld [vmem:[%s3 + $0x2c] sm:$0xf]
        %v1328 = vld [vmem:[%s3 + $0x30] sm:$0xf]
        %v1329 = vld [vmem:[%s3 + $0x34] sm:$0xf]
        %v1330 = vld [vmem:[%s3 + $0x38] sm:$0xf]
        %v1331 = vld [vmem:[%s3 + $0x3c] sm:$0xf]
        %v1332 = vld [vmem:[%s3 + $0x40] sm:$0xf]
        %v1333 = vld [vmem:[%s3 + $0x44] sm:$0xf]
        %v1334 = vld [vmem:[%s3 + $0x48] sm:$0xf]
        %v1335 = vld [vmem:[%s3 + $0x4c] sm:$0xf]
        %v1336 = vld [vmem:[%s3 + $0x50] sm:$0xf]
        %v1337 = vld [vmem:[%s3 + $0x54] sm:$0xf]
        %v1338 = vld [vmem:[%s3 + $0x58] sm:$0xf]
        %v1339 = vld [vmem:[%s3 + $0x5c] sm:$0xf]
        %v1340 = vld [vmem:[%s3 + $0x60] sm:$0xf]
        %v1341 = vld [vmem:[%s3 + $0x64] sm:$0xf]
        %v1342 = vld [vmem:[%s3 + $0x68] sm:$0xf]
        %v1343 = vld [vmem:[%s3 + $0x6c] sm:$0xf]
        %v1344 = vld [vmem:[%s3 + $0x70] sm:$0xf]
        %v1345 = vld [vmem:[%s3 + $0x74] sm:$0xf]
        %v1346 = vld [vmem:[%s3 + $0x78] sm:$0xf]
        %v1347 = vld [vmem:[%s3 + $0x7c] sm:$0xf]
        %v1348 = vld [vmem:[#allocation2] sm:$0x1]
        %v1350 = vlaneseq
        %v1351 = vshrl.u32 %v1350, 7
        %v1352 = vsub.s32 0, %v1351
        %v1353 = vrot.slane %v1348, %v1352
        %v1387 = vunpack.c.l.b16 %v1316
        %v1388 = vunpack.c.l.b16 %v1317
        %v1389 = vunpack.c.l.b16 %v1318
        %v1390 = vunpack.c.l.b16 %v1319
        %v1391 = vunpack.c.l.b16 %v1320
        %v1392 = vunpack.c.l.b16 %v1321
        %v1393 = vunpack.c.l.b16 %v1322
        %v1394 = vunpack.c.l.b16 %v1323
        %v1395 = vunpack.c.l.b16 %v1324
        %v1396 = vunpack.c.l.b16 %v1325
        %v1397 = vunpack.c.l.b16 %v1326
        %v1398 = vunpack.c.l.b16 %v1327
        %v1399 = vunpack.c.l.b16 %v1328
        %v1400 = vunpack.c.l.b16 %v1329
        %v1401 = vunpack.c.l.b16 %v1330
        %v1402 = vunpack.c.l.b16 %v1331
        %v1403 = vunpack.c.l.b16 %v1332
        %v1404 = vunpack.c.l.b16 %v1333
        %v1405 = vunpack.c.l.b16 %v1334
        %v1406 = vunpack.c.l.b16 %v1335
        %v1407 = vunpack.c.l.b16 %v1336
        %v1408 = vunpack.c.l.b16 %v1337
        %v1409 = vunpack.c.l.b16 %v1338
        %v1410 = vunpack.c.l.b16 %v1339
        %v1411 = vunpack.c.l.b16 %v1340
        %v1412 = vunpack.c.l.b16 %v1341
        %v1413 = vunpack.c.l.b16 %v1342
        %v1414 = vunpack.c.l.b16 %v1343
        %v1415 = vunpack.c.l.b16 %v1344
        %v1416 = vunpack.c.l.b16 %v1345
        %v1417 = vunpack.c.l.b16 %v1346
        %v1418 = vunpack.c.l.b16 %v1347
        %v1419 = vpack.c.b16 %v1388, %v1387
        %v1420 = vpack.c.b16 %v1390, %v1389
        %v1421 = vpack.c.b16 %v1392, %v1391
        %v1422 = vpack.c.b16 %v1394, %v1393
        %v1423 = vpack.c.b16 %v1396, %v1395
        %v1424 = vpack.c.b16 %v1398, %v1397
        %v1425 = vpack.c.b16 %v1400, %v1399
        %v1426 = vpack.c.b16 %v1402, %v1401
        %v1427 = vpack.c.b16 %v1404, %v1403
        %v1428 = vpack.c.b16 %v1406, %v1405
        %v1429 = vpack.c.b16 %v1408, %v1407
        %v1430 = vpack.c.b16 %v1410, %v1409
        %v1431 = vpack.c.b16 %v1412, %v1411
        %v1432 = vpack.c.b16 %v1414, %v1413
        %v1433 = vpack.c.b16 %v1416, %v1415
        %v1434 = vpack.c.b16 %v1418, %v1417
        %1451 = vmatprep.subr.bf16.mxu0 0
        %1452 = vmatpush1.bf16.msra.mxu0 %v1419
        %1453 = vmatprep.subr.bf16.mxu0 0
        %1454 = vmatpush1.bf16.msra.mxu0 %v1420
        %1455 = vmatprep.subr.bf16.mxu0 0
        %1456 = vmatpush1.bf16.msra.mxu0 %v1421
        %1457 = vmatprep.subr.bf16.mxu0 0
        %1458 = vmatpush1.bf16.msra.mxu0 %v1422
        %1459 = vmatprep.subr.bf16.mxu0 0
        %1460 = vmatpush1.bf16.msra.mxu0 %v1423
        %1461 = vmatprep.subr.bf16.mxu0 0
        %1462 = vmatpush1.bf16.msra.mxu0 %v1424
        %1463 = vmatprep.subr.bf16.mxu0 0
        %1464 = vmatpush1.bf16.msra.mxu0 %v1425
        %1465 = vmatprep.subr.bf16.mxu0 0
        %1466 = vmatpush1.bf16.msra.mxu0 %v1426
        %1467 = vmatprep.subr.bf16.mxu0 0
        %1468 = vmatpush1.bf16.msra.mxu0 %v1427
        %1469 = vmatprep.subr.bf16.mxu0 0
        %1470 = vmatpush1.bf16.msra.mxu0 %v1428
        %1471 = vmatprep.subr.bf16.mxu0 0
        %1472 = vmatpush1.bf16.msra.mxu0 %v1429
        %1473 = vmatprep.subr.bf16.mxu0 0
        %1474 = vmatpush1.bf16.msra.mxu0 %v1430
        %1475 = vmatprep.subr.bf16.mxu0 0
        %1476 = vmatpush1.bf16.msra.mxu0 %v1431
        %1477 = vmatprep.subr.bf16.mxu0 0
        %1478 = vmatpush1.bf16.msra.mxu0 %v1432
        %1479 = vmatprep.subr.bf16.mxu0 0
        %1480 = vmatpush1.bf16.msra.mxu0 %v1433
        %1481 = vmatprep.subr.bf16.mxu0 0
        %1482 = vmatpush1.bf16.msra.mxu0 %v1434
        %1483 = vmatprep.mubr.bf16.mxu0 %v1297
        %1484 = vmatmul.mubr.bf16.gmra.mrb[0].mxu0 %v1296
        %v1485 = vpop.f32.mrb[0].mxu0
        %v1486 = vadd.f32 %v1353, %v1485
        %v1487 = vpop.f32.mrb[0].mxu0
        %v1488 = vpop.f32.mrb[0].mxu0
        %v1489 = vadd.f32 %v1353, %v1488
        %v1490 = vpop.f32.mrb[0].mxu0
        %1491 = vmatprep.mubr.bf16.mxu0 %v1299
        %1492 = vmatmul.mubr.bf16.gmra.mrb[0].mxu0 %v1298
        %v1493 = vpop.f32.mrb[0].mxu0
        %v1494 = vadd.f32 %v1353, %v1493
        %v1495 = vpop.f32.mrb[0].mxu0
        %v1496 = vpop.f32.mrb[0].mxu0
        %v1497 = vadd.f32 %v1353, %v1496
        %v1498 = vpop.f32.mrb[0].mxu0
        %1499 = vmatprep.mubr.bf16.mxu0 %v1301
        %1500 = vmatmul.mubr.bf16.gmra.mrb[0].mxu0 %v1300
        %v1501 = vpop.f32.mrb[0].mxu0
        %v1502 = vadd.f32 %v1353, %v1501
        %v1503 = vpop.f32.mrb[0].mxu0
        %v1504 = vpop.f32.mrb[0].mxu0
        %v1505 = vadd.f32 %v1353, %v1504
        %v1506 = vpop.f32.mrb[0].mxu0
        %1507 = vmatprep.mubr.bf16.mxu0 %v1303
        %1508 = vmatmul.mubr.bf16.gmra.mrb[0].mxu0 %v1302
        %v1509 = vpop.f32.mrb[0].mxu0
        %v1510 = vadd.f32 %v1353, %v1509
        %v1511 = vpop.f32.mrb[0].mxu0
        %v1512 = vpop.f32.mrb[0].mxu0
        %v1513 = vadd.f32 %v1353, %v1512
        %v1514 = vpop.f32.mrb[0].mxu0
        %1515 = vmatprep.mubr.bf16.mxu0 %v1305
        %1516 = vmatmul.mubr.bf16.gmra.mrb[0].mxu0 %v1304
        %v1517 = vpop.f32.mrb[0].mxu0
        %v1518 = vadd.f32 %v1353, %v1517
        %v1519 = vpop.f32.mrb[0].mxu0
        %v1520 = vpop.f32.mrb[0].mxu0
        %v1521 = vadd.f32 %v1353, %v1520
        %v1522 = vpop.f32.mrb[0].mxu0
        %1523 = vmatprep.mubr.bf16.mxu0 %v1307
        %1524 = vmatmul.mubr.bf16.gmra.mrb[0].mxu0 %v1306
        %v1525 = vpop.f32.mrb[0].mxu0
        %v1526 = vadd.f32 %v1353, %v1525
        %v1527 = vpop.f32.mrb[0].mxu0
        %v1528 = vpop.f32.mrb[0].mxu0
        %v1529 = vadd.f32 %v1353, %v1528
        %v1530 = vpop.f32.mrb[0].mxu0
        %1531 = vmatprep.mubr.bf16.mxu0 %v1309
        %1532 = vmatmul.mubr.bf16.gmra.mrb[0].mxu0 %v1308
        %v1533 = vpop.f32.mrb[0].mxu0
        %v1534 = vadd.f32 %v1353, %v1533
        %v1535 = vpop.f32.mrb[0].mxu0
        %v1536 = vpop.f32.mrb[0].mxu0
        %v1537 = vadd.f32 %v1353, %v1536
        %v1538 = vpop.f32.mrb[0].mxu0
        %1539 = vmatprep.mubr.bf16.mxu0 %v1311
        %1540 = vmatmul.mubr.bf16.gmra.mrb[0].mxu0 %v1310
        %v1541 = vpop.f32.mrb[0].mxu0
        %v1542 = vadd.f32 %v1353, %v1541
        %v1543 = vpop.f32.mrb[0].mxu0
        %v1544 = vpop.f32.mrb[0].mxu0
        %v1545 = vadd.f32 %v1353, %v1544
        %v1546 = vpop.f32.mrb[0].mxu0
        %1547 = vmatprep.mubr.bf16.mxu0 %v1313
        %1548 = vmatmul.mubr.bf16.gmra.mrb[0].mxu0 %v1312
        %v1549 = vpop.f32.mrb[0].mxu0
        %v1550 = vadd.f32 %v1353, %v1549
        %v1551 = vpop.f32.mrb[0].mxu0
        %v1552 = vpop.f32.mrb[0].mxu0
        %v1553 = vadd.f32 %v1353, %v1552
        %v1554 = vpop.f32.mrb[0].mxu0
        %1555 = vmatprep.mubr.bf16.mxu0 %v1315
        %1556 = vmatmul.mubr.bf16.gmra.mrb[0].mxu0 %v1314
        %v1557 = vpop.f32.mrb[0].mxu0
        %v1558 = vadd.f32 %v1353, %v1557
        %v1559 = vpop.f32.mrb[0].mxu0
        %v1560 = vpop.f32.mrb[0].mxu0
        %v1561 = vpop.f32.mrb[0].mxu0
        %1562 = vdwg.mxu0
        %vm1563 = vcmask 7168
        %1564 = vst.msk [vmem:[%s263] sm:$0xff] %vm1563, %v1486
        %1565 = vst.msk [vmem:[%s263 + $0x8] sm:$0xff] %vm1563, %v1489
        %1566 = vst.msk [vmem:[%s263 + $0x10] sm:$0xff] %vm1563, %v1494
        %1567 = vst.msk [vmem:[%s263 + $0x18] sm:$0xff] %vm1563, %v1497
        %1568 = vst.msk [vmem:[%s263 + $0x20] sm:$0xff] %vm1563, %v1502
        %1569 = vst.msk [vmem:[%s263 + $0x28] sm:$0xff] %vm1563, %v1505
        %1570 = vst.msk [vmem:[%s263 + $0x30] sm:$0xff] %vm1563, %v1510
        %1571 = vst.msk [vmem:[%s263 + $0x38] sm:$0xff] %vm1563, %v1513
        %1572 = vst.msk [vmem:[%s263 + $0x40] sm:$0xff] %vm1563, %v1518
        %1573 = vst.msk [vmem:[%s263 + $0x48] sm:$0xff] %vm1563, %v1521
        %1574 = vst.msk [vmem:[%s263 + $0x50] sm:$0xff] %vm1563, %v1526
        %1575 = vst.msk [vmem:[%s263 + $0x58] sm:$0xff] %vm1563, %v1529
        %1576 = vst.msk [vmem:[%s263 + $0x60] sm:$0xff] %vm1563, %v1534
        %1577 = vst.msk [vmem:[%s263 + $0x68] sm:$0xff] %vm1563, %v1537
        %1578 = vst.msk [vmem:[%s263 + $0x70] sm:$0xff] %vm1563, %v1542
        %1579 = vst.msk [vmem:[%s263 + $0x78] sm:$0xff] %vm1563, %v1545
        %1580 = vst.msk [vmem:[%s263 + $0x80] sm:$0xff] %vm1563, %v1550
        %1581 = vst.msk [vmem:[%s263 + $0x88] sm:$0xff] %vm1563, %v1553
        %1582 = vst.msk [vmem:[%s263 + $0x90] sm:$0xff] %vm1563, %v1558
        %s1583 = smul.u32 19, %s22
        %p1584 = scmp.lt.s32.totalorder %s1583, 37
        %s1585 = scalar_select %p1584, %s1583, 37
        %s1586 = smul.addr %s1585, 8
        %s1587 = scalar_lea.vmem %s5, %s1586
        // Predicated region
        $region49: #{tpu_custom_call.1} parent=39 // pred_check
          %p1588 = pneg %p150
        $region50: #{tpu_custom_call.1} parent=39 // pred_check_branch
          %1590 = sbr.rel (%p1588) target = $region52
        $region51: #{tpu_custom_call.1} parent=39 // pred_region
          %s1591 = smul.u32 19, %s22
        $region52: #{tpu_custom_call.1} parent=39 // pred_fallthru
          _
      $region40: #{tpu_custom_call.1} parent=5 // pred_fallthru
        _
      %p1592 = scmp.le.s32.totalorder 2, %s17
      // Predicated region
      $region53: #{tpu_custom_call.1} parent=5 // pred_check
        %p1593 = pneg %p1592
      $region54: #{tpu_custom_call.1} parent=5 // pred_check_branch
        %1595 = sbr.rel (%p1593) target = $region56
      $region55: #{tpu_custom_call.1} parent=5 // pred_region
        %s1596 = ssub.s32 %s17, 2
        // Predicated region
        $region57: #{tpu_custom_call.1} parent=55 // pred_check
          %p1597 = pneg %p156
        $region58: #{tpu_custom_call.1} parent=55 // pred_check_branch
          %1599 = sbr.rel (%p1597) target = $region60
        $region59: #{tpu_custom_call.1} parent=55 // pred_region
          %s1600 = smul.u32 19, %s23
          %p1601 = scmp.lt.s32.totalorder %s1600, 37
          %s1602 = scalar_select %p1601, %s1600, 37
          %s1603 = smul.addr %s1602, 8
          %s1604 = scalar_lea.vmem %s5, %s1603
        $region60: #{tpu_custom_call.1} parent=55 // pred_fallthru
          _
      $region56: #{tpu_custom_call.1} parent=5 // pred_fallthru
        _
    $region6: #{tpu_custom_call.1} parent=1 // loop_footer
      %s21 = sadd.s32 1, %s17
    $region7: #{tpu_custom_call.1} parent=1 // loop_footer_branch
      %16 = sbr.rel target = $region3
    $region8: #{tpu_custom_call.1} parent=1 // loop_exit
      _
    %1605 = vsyncpa [#allocation4], 1
    %s1606 = scalar_lea.sflag [#allocation4], 1
    %1607 = vsyncpa %s1606, 1
    %1608 = vsyncpa [#allocation6], 1

</llo_original>
